<compile_context>
chip_gen: v7x
topology: tpu7x:2x2x1
jax: 0.10.0
libtpu: 0.0.40
codegen_flags: <defaults>
</compile_context>

<pallas_src>
import jax
import jax.numpy as jnp
import numpy as np
from jax.experimental import pallas as pl
from jax.experimental.pallas import tpu as pltpu

_LANES = 128


def unified_attention_kernel(q_ref, k_ref, v_ref,
                             wq_ref, wk_ref, wv_ref,
                             gamma_ref, beta_ref,
                             o_ref):
    bt, s, d = q_ref.shape          # d = REAL feature width (inputs are unpadded)
    dp = wq_ref.shape[1]            # lane-padded projection width (>= d)
    f32 = jnp.float32
    # bf16 inputs keep bf16 MXU operands (~3x MXU throughput); f32 inputs stay exact.
    mxu_dtype = jnp.bfloat16 if q_ref.dtype == jnp.bfloat16 else f32

    wq, wk, wv = wq_ref[...], wk_ref[...], wv_ref[...]

    # ---- Projections (f32 accumulation via preferred_element_type).  Fuse the
    # (bt, s) dims into one 2-D matmul only when the merge is sublane-clean;
    # otherwise use a batched dot_general to avoid a relayout copy.
    if s % 8 == 0:
        def proj(x_ref, w):
            x2 = x_ref[...].reshape(bt * s, d)
            return jnp.dot(x2, w, preferred_element_type=f32).reshape(bt, s, dp)
    else:
        def proj(x_ref, w):
            return jax.lax.dot_general(
                x_ref[...], w, dimension_numbers=(((2,), (0,)), ((), ())),
                preferred_element_type=f32)

    qp = proj(q_ref, wq)
    kp = proj(k_ref, wk)
    vp = proj(v_ref, wv)

    # Fold the softmax temperature into qp: bt*s*dp multiplies instead of bt*s*s.
    inv_temp = f32(1.0 / (float(d) ** 0.5 + 1e-6))
    qp = qp * inv_temp

    # ---- Attention scores: contract the last dims of both operands (no kp.T).
    scores = jax.lax.dot_general(
        qp.astype(mxu_dtype), kp.astype(mxu_dtype),
        dimension_numbers=(((2,), (2,)), ((0,), (0,))),
        preferred_element_type=f32)                         # (bt, s, s)

    # ---- Numerically stable softmax; normalization deferred past the PV matmul.
    scores = scores - jnp.max(scores, axis=-1, keepdims=True)
    p = jnp.exp(scores)
    denom = jnp.sum(p, axis=-1, keepdims=True)              # (bt, s, 1)
    # TODO(synk): training-mode attention dropout not implemented (eval path only).

    v_att = jax.lax.dot_general(
        p.astype(mxu_dtype), vp.astype(mxu_dtype),
        dimension_numbers=(((2,), (1,)), ((0,), (0,))),
        preferred_element_type=f32)                          # (bt, s, dp)
    # Normalize AFTER the PV matmul: bt*s*dp multiplies instead of bt*s*s.
    # (approx=True would move the reciprocal onto the EUP slot at ~2^-12 rel. error;
    #  kept exact to hold the 1e-4 self-test tolerance.)
    v_att = v_att * pl.reciprocal(denom, approx=False)

    # ---- Residual (ORIGINAL V) + LayerNorm at the real feature width d.
    # W pad columns are exact zeros, so dropping v_att's pad lanes loses nothing and
    # the LN statistics need no lane masking (exact mean/var over d).
    if dp != d:
        v_att = v_att[:, :, :d]
    x = v_ref[...].astype(f32) + v_att
    inv_d = f32(1.0 / d)
    mu = jnp.sum(x, axis=-1, keepdims=True) * inv_d
    xc = x - mu
    var = jnp.sum(xc * xc, axis=-1, keepdims=True) * inv_d
    y = xc * jax.lax.rsqrt(var + f32(1e-5))
    y = y * gamma_ref[...].astype(f32) + beta_ref[...].astype(f32)
    # Store with last-dim = d (full extent): no padded output DMA, no post-kernel slice.
    o_ref[...] = y.astype(o_ref.dtype)


# --------------------------------------------------------------------------- wrapper

def _vmem_capacity_bytes():
    try:
        return int(pltpu.get_tpu_info().vmem_capacity_bytes)
    except Exception:
        return 64 << 20   # most conservative physical VMEM (v7x per-TensorCore)


def _num_tensorcores():
    # v7x has 2 TensorCores per chip (v4/v5p megacore too); v5e/v6e have 1.
    try:
        kind = jax.devices()[0].device_kind.lower()
    except Exception:
        return 1
    if "v7" in kind or "7x" in kind or "v4" in kind or "v5p" in kind:
        return 2
    return 1


def _vmem_bytes_per_step(bt, S, D, Dp, isz):
    qkv_out = (3 * 2 + 2) * bt * S * D * isz       # double-buffered Q/K/V + out blocks
    weights = 3 * D * Dp * isz + 2 * D * isz       # single-buffered weights + gamma/beta
    proj = 3 * bt * S * Dp * 4                     # qp / kp / vp (f32)
    attn = 2 * bt * S * S * 4                      # scores + p (f32)
    epil = 2 * bt * S * Dp * 4                     # v_att + residual/LN temporaries (f32)
    return qkv_out + weights + proj + attn + epil


def _pick_batch_block(B, S, D, Dp, isz, vmem_budget, n_cores):
    divisors = [d for d in range(1, B + 1) if B % d == 0]
    fits = [d for d in divisors
            if _vmem_bytes_per_step(d, S, D, Dp, isz) <= vmem_budget] or [1]
    if n_cores > 1:
        # Keep >=2 grid steps so a parallel grid axis can be sharded across cores.
        multi = [d for d in fits if B // d >= n_cores]
        if multi:
            return max(multi)
    # Single TensorCore: extra grid steps are pure overhead; take the largest block.
    return max(fits)


def unified_attention(Q, K, V, W_q, W_k, W_v, gamma, beta, *, batch_block=None):
    B, S, D = Q.shape
    Dp = ((D + _LANES - 1) // _LANES) * _LANES
    pad = Dp - D

    # Pad ONLY the weights' output dim (zero columns => exact-zero pad lanes in
    # qp/kp/vp/v_att).  Q/K/V and the output stay unpadded: contraction dim = D.
    if pad:
        pad_w = lambda w: jnp.pad(w, ((0, 0), (0, pad)))
        Wq, Wk, Wv = pad_w(W_q), pad_w(W_k), pad_w(W_v)
    else:
        Wq, Wk, Wv = W_q, W_k, W_v
    g2 = gamma.reshape(1, D)
    b2 = beta.reshape(1, D)

    isz = jnp.dtype(Q.dtype).itemsize
    vmem_cap = _vmem_capacity_bytes()
    vmem_budget = max(vmem_cap // 2, vmem_cap - (16 << 20))   # leave headroom
    n_cores = _num_tensorcores()
    if batch_block is None:
        batch_block = _pick_batch_block(B, S, D, Dp, isz, vmem_budget, n_cores)
    assert B % batch_block == 0, "batch_block must divide B"
    grid = (B // batch_block,)

    est = _vmem_bytes_per_step(batch_block, S, D, Dp, isz)
    vmem_limit = int(min(vmem_cap, max(2 * est, 32 << 20)))

    def qkv_spec():
        return pl.BlockSpec((batch_block, S, D), lambda b: (b, 0, 0))

    def const_spec(shape, single):
        if single:
            return pl.BlockSpec(shape, lambda b: (0, 0), pipeline_mode=pl.Buffered(1))
        return pl.BlockSpec(shape, lambda b: (0, 0))

    def run(single_buffer_consts):
        return pl.pallas_call(
            unified_attention_kernel,
            out_shape=jax.ShapeDtypeStruct((B, S, D), Q.dtype),
            grid_spec=pltpu.PrefetchScalarGridSpec(
                num_scalar_prefetch=0,
                grid=grid,
                in_specs=[
                    qkv_spec(), qkv_spec(), qkv_spec(),          # Q, K, V (unpadded)
                    const_spec((D, Dp), single_buffer_consts),   # W_q
                    const_spec((D, Dp), single_buffer_consts),   # W_k
                    const_spec((D, Dp), single_buffer_consts),   # W_v
                    const_spec((1, D), single_buffer_consts),    # gamma
                    const_spec((1, D), single_buffer_consts),    # beta
                ],
                out_specs=pl.BlockSpec((batch_block, S, D), lambda b: (b, 0, 0)),
            ),
            compiler_params=pltpu.CompilerParams(
                dimension_semantics=("parallel",),
                vmem_limit_bytes=vmem_limit),
        )(Q, K, V, Wq, Wk, Wv, g2, b2)

    try:
        return run(True)
    except Exception:
        # Fallback if this jax build rejects single-buffered constant blocks.
        return run(False)


# --------------------------------------------------------------------------- self-test

def reference(Q, K, V, W_q, W_k, W_v, gamma, beta):
    D = Q.shape[-1]
    Qp = jnp.einsum('bsd,de->bse', Q, W_q)
    Kp = jnp.einsum('bsd,de->bse', K, W_k)
    Vp = jnp.einsum('bsd,de->bse', V, W_v)
    scores = jnp.einsum('bqd,bkd->bqk', Qp, Kp) / (D ** 0.5 + 1e-6)
    p = jax.nn.softmax(scores, axis=-1)
    V_att = jnp.einsum('bqk,bkd->bqd', p, Vp)
    x = V + V_att
    mu = jnp.mean(x, axis=-1, keepdims=True)
    var = jnp.mean(jnp.square(x - mu), axis=-1, keepdims=True)
    return (x - mu) / jnp.sqrt(var + 1e-5) * gamma + beta


if __name__ == "__main__":
    B, S, D = 2, 8, 32   # batch, seq_len, input_size

    key = jax.random.PRNGKey(0)
    kq, kk, kv, kwq, kwk, kwv = jax.random.split(key, 6)

    Q = jax.random.normal(kq, (B, S, D), dtype=jnp.float32)
    K = jax.random.normal(kk, (B, S, D), dtype=jnp.float32)
    V = jax.random.normal(kv, (B, S, D), dtype=jnp.float32)

    # Parameter init mirrors __init_weights__: N(0, sqrt(2/input_size)).
    std = float(np.sqrt(2.0 / D))
    W_q = std * jax.random.normal(kwq, (D, D), dtype=jnp.float32)
    W_k = std * jax.random.normal(kwk, (D, D), dtype=jnp.float32)
    W_v = std * jax.random.normal(kwv, (D, D), dtype=jnp.float32)
    # nn.LayerNorm default init: weight=1, bias=0.
    gamma = jnp.ones((D,), dtype=jnp.float32)
    beta = jnp.zeros((D,), dtype=jnp.float32)

    out = unified_attention(Q, K, V, W_q, W_k, W_v, gamma, beta)
    out = jax.block_until_ready(out)

    ref = reference(Q, K, V, W_q, W_k, W_v, gamma, beta)
    np.testing.assert_allclose(np.asarray(out), np.asarray(ref), atol=1e-4, rtol=1e-4)

    print("KERNEL_OK")
</pallas_src>

<mosaic_0001>
module attributes {stable_mosaic.version = 11 : i64} {
  func.func @unified_attention_kernel(%arg0: i32, %arg1: memref<2x8x32xf32, #tpu.memory_space<vmem>>, %arg2: memref<2x8x32xf32, #tpu.memory_space<vmem>>, %arg3: memref<2x8x32xf32, #tpu.memory_space<vmem>>, %arg4: memref<32x128xf32, #tpu.memory_space<vmem>>, %arg5: memref<32x128xf32, #tpu.memory_space<vmem>>, %arg6: memref<32x128xf32, #tpu.memory_space<vmem>>, %arg7: memref<1x32xf32, #tpu.memory_space<vmem>>, %arg8: memref<1x32xf32, #tpu.memory_space<vmem>>, %arg9: memref<2x8x32xf32, #tpu.memory_space<vmem>>) attributes {dimension_semantics = [#tpu.dimension_semantics<parallel>], iteration_bounds = array<i64: 1>, scalar_prefetch = 0 : i64, scratch_operands = 0 : i64, tpu.core_type = #tpu.core_type<tc>, window_params = [{transform_indices = @transform_0, window_bounds = array<i64: 2, 8, 32>}, {transform_indices = @transform_1, window_bounds = array<i64: 2, 8, 32>}, {transform_indices = @transform_2, window_bounds = array<i64: 2, 8, 32>}, {pipeline_mode = #tpu.pipeline_mode<synchronous>, transform_indices = @transform_3, window_bounds = array<i64: 32, 128>}, {pipeline_mode = #tpu.pipeline_mode<synchronous>, transform_indices = @transform_4, window_bounds = array<i64: 32, 128>}, {pipeline_mode = #tpu.pipeline_mode<synchronous>, transform_indices = @transform_5, window_bounds = array<i64: 32, 128>}, {pipeline_mode = #tpu.pipeline_mode<synchronous>, transform_indices = @transform_6, window_bounds = array<i64: 1, 32>}, {pipeline_mode = #tpu.pipeline_mode<synchronous>, transform_indices = @transform_7, window_bounds = array<i64: 1, 32>}, {transform_indices = @transform_8, window_bounds = array<i64: 2, 8, 32>}]} {
    %c0 = arith.constant 0 : index
    %c0_0 = arith.constant 0 : index
    %0 = vector.load %arg4[%c0, %c0_0] : memref<32x128xf32, #tpu.memory_space<vmem>>, vector<32x128xf32>
    %c0_1 = arith.constant 0 : index
    %c0_2 = arith.constant 0 : index
    %1 = vector.load %arg5[%c0_1, %c0_2] : memref<32x128xf32, #tpu.memory_space<vmem>>, vector<32x128xf32>
    %c0_3 = arith.constant 0 : index
    %c0_4 = arith.constant 0 : index
    %2 = vector.load %arg6[%c0_3, %c0_4] : memref<32x128xf32, #tpu.memory_space<vmem>>, vector<32x128xf32>
    %c0_5 = arith.constant 0 : index
    %c0_6 = arith.constant 0 : index
    %c0_7 = arith.constant 0 : index
    %3 = vector.load %arg1[%c0_5, %c0_6, %c0_7] : memref<2x8x32xf32, #tpu.memory_space<vmem>>, vector<2x8x32xf32>
    %4 = vector.shape_cast %3 : vector<2x8x32xf32> to vector<16x32xf32>
    %cst = arith.constant dense<0.000000e+00> : vector<16x128xf32>
    %5 = tpu.matmul %4, %0, %cst {dimension_numbers = #tpu.dot_dimension_numbers<[1], [0], [0], [1], [0, 0, 1, 1], [], []>} : vector<16x32xf32>, vector<32x128xf32>, vector<16x128xf32> -> vector<16x128xf32>
    %6 = vector.shape_cast %5 : vector<16x128xf32> to vector<2x8x128xf32>
    %c0_8 = arith.constant 0 : index
    %c0_9 = arith.constant 0 : index
    %c0_10 = arith.constant 0 : index
    %7 = vector.load %arg2[%c0_8, %c0_9, %c0_10] : memref<2x8x32xf32, #tpu.memory_space<vmem>>, vector<2x8x32xf32>
    %8 = vector.shape_cast %7 : vector<2x8x32xf32> to vector<16x32xf32>
    %cst_11 = arith.constant dense<0.000000e+00> : vector<16x128xf32>
    %9 = tpu.matmul %8, %1, %cst_11 {dimension_numbers = #tpu.dot_dimension_numbers<[1], [0], [0], [1], [0, 0, 1, 1], [], []>} : vector<16x32xf32>, vector<32x128xf32>, vector<16x128xf32> -> vector<16x128xf32>
    %10 = vector.shape_cast %9 : vector<16x128xf32> to vector<2x8x128xf32>
    %c0_12 = arith.constant 0 : index
    %c0_13 = arith.constant 0 : index
    %c0_14 = arith.constant 0 : index
    %11 = vector.load %arg3[%c0_12, %c0_13, %c0_14] : memref<2x8x32xf32, #tpu.memory_space<vmem>>, vector<2x8x32xf32>
    %12 = vector.shape_cast %11 : vector<2x8x32xf32> to vector<16x32xf32>
    %cst_15 = arith.constant dense<0.000000e+00> : vector<16x128xf32>
    %13 = tpu.matmul %12, %2, %cst_15 {dimension_numbers = #tpu.dot_dimension_numbers<[1], [0], [0], [1], [0, 0, 1, 1], [], []>} : vector<16x32xf32>, vector<32x128xf32>, vector<16x128xf32> -> vector<16x128xf32>
    %14 = vector.shape_cast %13 : vector<16x128xf32> to vector<2x8x128xf32>
    %cst_16 = arith.constant 0.176776662 : f32
    %15 = vector.broadcast %cst_16 : f32 to vector<2x8x128xf32>
    %16 = arith.mulf %6, %15 : vector<2x8x128xf32>
    %cst_17 = arith.constant dense<0.000000e+00> : vector<2x8x8xf32>
    %17 = tpu.matmul %16, %10, %cst_17 {dimension_numbers = #tpu.dot_dimension_numbers<[2], [2], [1], [1], [0, 0, 0, 1, 1, 1], [0], [0]>} : vector<2x8x128xf32>, vector<2x8x128xf32>, vector<2x8x8xf32> -> vector<2x8x8xf32>
    %cst_18 = arith.constant dense<0xFF800000> : vector<2x8xf32>
    %18 = vector.multi_reduction <maximumf>, %17, %cst_18 [2] : vector<2x8x8xf32> to vector<2x8xf32>
    %19 = vector.shape_cast %18 : vector<2x8xf32> to vector<2x8x1xf32>
    %20 = vector.broadcast %19 : vector<2x8x1xf32> to vector<2x8x8xf32>
    %21 = arith.subf %17, %20 : vector<2x8x8xf32>
    %22 = math.exp %21 : vector<2x8x8xf32>
    %cst_19 = arith.constant dense<0.000000e+00> : vector<2x8xf32>
    %23 = vector.multi_reduction <add>, %22, %cst_19 [2] : vector<2x8x8xf32> to vector<2x8xf32>
    %24 = vector.shape_cast %23 : vector<2x8xf32> to vector<2x8x1xf32>
    %cst_20 = arith.constant dense<0.000000e+00> : vector<2x8x128xf32>
    %25 = tpu.matmul %22, %14, %cst_20 {dimension_numbers = #tpu.dot_dimension_numbers<[2], [1], [1], [2], [0, 0, 0, 1, 1, 2], [0], [0]>} : vector<2x8x8xf32>, vector<2x8x128xf32>, vector<2x8x128xf32> -> vector<2x8x128xf32>
    %26 = tpu.reciprocal %24 : vector<2x8x1xf32> -> vector<2x8x1xf32>
    %27 = vector.broadcast %26 : vector<2x8x1xf32> to vector<2x8x128xf32>
    %28 = arith.mulf %25, %27 : vector<2x8x128xf32>
    %29 = vector.extract_strided_slice %28 {offsets = [0, 0, 0], sizes = [2, 8, 32], strides = [1, 1, 1]} : vector<2x8x128xf32> to vector<2x8x32xf32>
    %c0_21 = arith.constant 0 : index
    %c0_22 = arith.constant 0 : index
    %c0_23 = arith.constant 0 : index
    %30 = vector.load %arg3[%c0_21, %c0_22, %c0_23] : memref<2x8x32xf32, #tpu.memory_space<vmem>>, vector<2x8x32xf32>
    %31 = arith.addf %30, %29 : vector<2x8x32xf32>
    %cst_24 = arith.constant dense<0.000000e+00> : vector<2x8xf32>
    %32 = vector.multi_reduction <add>, %31, %cst_24 [2] : vector<2x8x32xf32> to vector<2x8xf32>
    %33 = vector.shape_cast %32 : vector<2x8xf32> to vector<2x8x1xf32>
    %cst_25 = arith.constant 3.125000e-02 : f32
    %34 = vector.broadcast %cst_25 : f32 to vector<2x8x1xf32>
    %35 = arith.mulf %33, %34 : vector<2x8x1xf32>
    %36 = vector.broadcast %35 : vector<2x8x1xf32> to vector<2x8x32xf32>
    %37 = arith.subf %31, %36 : vector<2x8x32xf32>
    %38 = arith.mulf %37, %37 : vector<2x8x32xf32>
    %cst_26 = arith.constant dense<0.000000e+00> : vector<2x8xf32>
    %39 = vector.multi_reduction <add>, %38, %cst_26 [2] : vector<2x8x32xf32> to vector<2x8xf32>
    %40 = vector.shape_cast %39 : vector<2x8xf32> to vector<2x8x1xf32>
    %cst_27 = arith.constant 3.125000e-02 : f32
    %41 = vector.broadcast %cst_27 : f32 to vector<2x8x1xf32>
    %42 = arith.mulf %40, %41 : vector<2x8x1xf32>
    %cst_28 = arith.constant 9.99999974E-6 : f32
    %43 = vector.broadcast %cst_28 : f32 to vector<2x8x1xf32>
    %44 = arith.addf %42, %43 : vector<2x8x1xf32>
    %45 = math.rsqrt %44 : vector<2x8x1xf32>
    %46 = vector.broadcast %45 : vector<2x8x1xf32> to vector<2x8x32xf32>
    %47 = arith.mulf %37, %46 : vector<2x8x32xf32>
    %c0_29 = arith.constant 0 : index
    %c0_30 = arith.constant 0 : index
    %48 = vector.load %arg7[%c0_29, %c0_30] : memref<1x32xf32, #tpu.memory_space<vmem>>, vector<1x32xf32>
    %49 = vector.shape_cast %48 : vector<1x32xf32> to vector<1x1x32xf32>
    %50 = vector.broadcast %49 : vector<1x1x32xf32> to vector<2x8x32xf32>
    %51 = arith.mulf %47, %50 : vector<2x8x32xf32>
    %c0_31 = arith.constant 0 : index
    %c0_32 = arith.constant 0 : index
    %52 = vector.load %arg8[%c0_31, %c0_32] : memref<1x32xf32, #tpu.memory_space<vmem>>, vector<1x32xf32>
    %53 = vector.shape_cast %52 : vector<1x32xf32> to vector<1x1x32xf32>
    %54 = vector.broadcast %53 : vector<1x1x32xf32> to vector<2x8x32xf32>
    %55 = arith.addf %51, %54 : vector<2x8x32xf32>
    %c0_33 = arith.constant 0 : index
    %c0_34 = arith.constant 0 : index
    %c0_35 = arith.constant 0 : index
    %56 = vector.load %arg9[%c0_33, %c0_34, %c0_35] : memref<2x8x32xf32, #tpu.memory_space<vmem>>, vector<2x8x32xf32>
    tpu.vector_store %arg9[%c0_33, %c0_34, %c0_35], %55 {strides = array<i32>} : memref<2x8x32xf32, #tpu.memory_space<vmem>>, vector<2x8x32xf32>,
    return
  }
  func.func @transform_0(%arg0: i32) -> (i32, i32, i32) {
    %c0_i32 = arith.constant 0 : i32
    %c0_i32_0 = arith.constant 0 : i32
    %c0_i32_1 = arith.constant 0 : i32
    return %arg0, %c0_i32, %c0_i32_0 : i32, i32, i32
  }
  func.func @transform_1(%arg0: i32) -> (i32, i32, i32) {
    %c0_i32 = arith.constant 0 : i32
    %c0_i32_0 = arith.constant 0 : i32
    %c0_i32_1 = arith.constant 0 : i32
    return %arg0, %c0_i32, %c0_i32_0 : i32, i32, i32
  }
  func.func @transform_2(%arg0: i32) -> (i32, i32, i32) {
    %c0_i32 = arith.constant 0 : i32
    %c0_i32_0 = arith.constant 0 : i32
    %c0_i32_1 = arith.constant 0 : i32
    return %arg0, %c0_i32, %c0_i32_0 : i32, i32, i32
  }
  func.func @transform_3(%arg0: i32) -> (i32, i32) {
    %c0_i32 = arith.constant 0 : i32
    %c0_i32_0 = arith.constant 0 : i32
    %c0_i32_1 = arith.constant 0 : i32
    return %c0_i32, %c0_i32_0 : i32, i32
  }
  func.func @transform_4(%arg0: i32) -> (i32, i32) {
    %c0_i32 = arith.constant 0 : i32
    %c0_i32_0 = arith.constant 0 : i32
    %c0_i32_1 = arith.constant 0 : i32
    return %c0_i32, %c0_i32_0 : i32, i32
  }
  func.func @transform_5(%arg0: i32) -> (i32, i32) {
    %c0_i32 = arith.constant 0 : i32
    %c0_i32_0 = arith.constant 0 : i32
    %c0_i32_1 = arith.constant 0 : i32
    return %c0_i32, %c0_i32_0 : i32, i32
  }
  func.func @transform_6(%arg0: i32) -> (i32, i32) {
    %c0_i32 = arith.constant 0 : i32
    %c0_i32_0 = arith.constant 0 : i32
    %c0_i32_1 = arith.constant 0 : i32
    return %c0_i32, %c0_i32_0 : i32, i32
  }
  func.func @transform_7(%arg0: i32) -> (i32, i32) {
    %c0_i32 = arith.constant 0 : i32
    %c0_i32_0 = arith.constant 0 : i32
    %c0_i32_1 = arith.constant 0 : i32
    return %c0_i32, %c0_i32_0 : i32, i32
  }
  func.func @transform_8(%arg0: i32) -> (i32, i32, i32) {
    %c0_i32 = arith.constant 0 : i32
    %c0_i32_0 = arith.constant 0 : i32
    %c0_i32_1 = arith.constant 0 : i32
    return %arg0, %c0_i32, %c0_i32_0 : i32, i32, i32
  }
}

module attributes {stable_mosaic.version = 11 : i64} {
  func.func @unified_attention_kernel(%arg0: i32, %arg1: memref<2x8x32xf32, #tpu.memory_space<vmem>>, %arg2: memref<2x8x32xf32, #tpu.memory_space<vmem>>, %arg3: memref<2x8x32xf32, #tpu.memory_space<vmem>>, %arg4: memref<32x128xf32, #tpu.memory_space<vmem>>, %arg5: memref<32x128xf32, #tpu.memory_space<vmem>>, %arg6: memref<32x128xf32, #tpu.memory_space<vmem>>, %arg7: memref<1x32xf32, #tpu.memory_space<vmem>>, %arg8: memref<1x32xf32, #tpu.memory_space<vmem>>, %arg9: memref<2x8x32xf32, #tpu.memory_space<vmem>>) attributes {dimension_semantics = [#tpu.dimension_semantics<parallel>], iteration_bounds = array<i64: 1>, scalar_prefetch = 0 : i64, scratch_operands = 0 : i64, tpu.core_type = #tpu.core_type<tc>, window_params = [{transform_indices = @transform_0, window_bounds = array<i64: 2, 8, 32>}, {transform_indices = @transform_1, window_bounds = array<i64: 2, 8, 32>}, {transform_indices = @transform_2, window_bounds = array<i64: 2, 8, 32>}, {pipeline_mode = #tpu.pipeline_mode<synchronous>, transform_indices = @transform_3, window_bounds = array<i64: 32, 128>}, {pipeline_mode = #tpu.pipeline_mode<synchronous>, transform_indices = @transform_4, window_bounds = array<i64: 32, 128>}, {pipeline_mode = #tpu.pipeline_mode<synchronous>, transform_indices = @transform_5, window_bounds = array<i64: 32, 128>}, {pipeline_mode = #tpu.pipeline_mode<synchronous>, transform_indices = @transform_6, window_bounds = array<i64: 1, 32>}, {pipeline_mode = #tpu.pipeline_mode<synchronous>, transform_indices = @transform_7, window_bounds = array<i64: 1, 32>}, {transform_indices = @transform_8, window_bounds = array<i64: 2, 8, 32>}]} {
    %c0 = arith.constant 0 : index
    %c0_0 = arith.constant 0 : index
    %0 = vector.load %arg4[%c0, %c0_0] : memref<32x128xf32, #tpu.memory_space<vmem>>, vector<32x128xf32>
    %c0_1 = arith.constant 0 : index
    %c0_2 = arith.constant 0 : index
    %1 = vector.load %arg5[%c0_1, %c0_2] : memref<32x128xf32, #tpu.memory_space<vmem>>, vector<32x128xf32>
    %c0_3 = arith.constant 0 : index
    %c0_4 = arith.constant 0 : index
    %2 = vector.load %arg6[%c0_3, %c0_4] : memref<32x128xf32, #tpu.memory_space<vmem>>, vector<32x128xf32>
    %c0_5 = arith.constant 0 : index
    %c0_6 = arith.constant 0 : index
    %c0_7 = arith.constant 0 : index
    %3 = vector.load %arg1[%c0_5, %c0_6, %c0_7] : memref<2x8x32xf32, #tpu.memory_space<vmem>>, vector<2x8x32xf32>
    %4 = vector.shape_cast %3 : vector<2x8x32xf32> to vector<16x32xf32>
    %cst = arith.constant dense<0.000000e+00> : vector<16x128xf32>
    %5 = tpu.matmul %4, %0, %cst {dimension_numbers = #tpu.dot_dimension_numbers<[1], [0], [0], [1], [0, 0, 1, 1], [], []>} : vector<16x32xf32>, vector<32x128xf32>, vector<16x128xf32> -> vector<16x128xf32>
    %6 = vector.shape_cast %5 : vector<16x128xf32> to vector<2x8x128xf32>
    %c0_8 = arith.constant 0 : index
    %c0_9 = arith.constant 0 : index
    %c0_10 = arith.constant 0 : index
    %7 = vector.load %arg2[%c0_8, %c0_9, %c0_10] : memref<2x8x32xf32, #tpu.memory_space<vmem>>, vector<2x8x32xf32>
    %8 = vector.shape_cast %7 : vector<2x8x32xf32> to vector<16x32xf32>
    %cst_11 = arith.constant dense<0.000000e+00> : vector<16x128xf32>
    %9 = tpu.matmul %8, %1, %cst_11 {dimension_numbers = #tpu.dot_dimension_numbers<[1], [0], [0], [1], [0, 0, 1, 1], [], []>} : vector<16x32xf32>, vector<32x128xf32>, vector<16x128xf32> -> vector<16x128xf32>
    %10 = vector.shape_cast %9 : vector<16x128xf32> to vector<2x8x128xf32>
    %c0_12 = arith.constant 0 : index
    %c0_13 = arith.constant 0 : index
    %c0_14 = arith.constant 0 : index
    %11 = vector.load %arg3[%c0_12, %c0_13, %c0_14] : memref<2x8x32xf32, #tpu.memory_space<vmem>>, vector<2x8x32xf32>
    %12 = vector.shape_cast %11 : vector<2x8x32xf32> to vector<16x32xf32>
    %cst_15 = arith.constant dense<0.000000e+00> : vector<16x128xf32>
    %13 = tpu.matmul %12, %2, %cst_15 {dimension_numbers = #tpu.dot_dimension_numbers<[1], [0], [0], [1], [0, 0, 1, 1], [], []>} : vector<16x32xf32>, vector<32x128xf32>, vector<16x128xf32> -> vector<16x128xf32>
    %14 = vector.shape_cast %13 : vector<16x128xf32> to vector<2x8x128xf32>
    %cst_16 = arith.constant 0.176776662 : f32
    %15 = vector.broadcast %cst_16 : f32 to vector<2x8x128xf32>
    %16 = arith.mulf %6, %15 : vector<2x8x128xf32>
    %cst_17 = arith.constant dense<0.000000e+00> : vector<2x8x8xf32>
    %17 = tpu.matmul %16, %10, %cst_17 {dimension_numbers = #tpu.dot_dimension_numbers<[2], [2], [1], [1], [0, 0, 0, 1, 1, 1], [0], [0]>} : vector<2x8x128xf32>, vector<2x8x128xf32>, vector<2x8x8xf32> -> vector<2x8x8xf32>
    %cst_18 = arith.constant dense<0xFF800000> : vector<2x8xf32>
    %18 = vector.multi_reduction <maximumf>, %17, %cst_18 [2] : vector<2x8x8xf32> to vector<2x8xf32>
    %19 = vector.shape_cast %18 : vector<2x8xf32> to vector<2x8x1xf32>
    %20 = vector.broadcast %19 : vector<2x8x1xf32> to vector<2x8x8xf32>
    %21 = arith.subf %17, %20 : vector<2x8x8xf32>
    %22 = math.exp %21 : vector<2x8x8xf32>
    %cst_19 = arith.constant dense<0.000000e+00> : vector<2x8xf32>
    %23 = vector.multi_reduction <add>, %22, %cst_19 [2] : vector<2x8x8xf32> to vector<2x8xf32>
    %24 = vector.shape_cast %23 : vector<2x8xf32> to vector<2x8x1xf32>
    %cst_20 = arith.constant dense<0.000000e+00> : vector<2x8x128xf32>
    %25 = tpu.matmul %22, %14, %cst_20 {dimension_numbers = #tpu.dot_dimension_numbers<[2], [1], [1], [2], [0, 0, 0, 1, 1, 2], [0], [0]>} : vector<2x8x8xf32>, vector<2x8x128xf32>, vector<2x8x128xf32> -> vector<2x8x128xf32>
    %26 = tpu.reciprocal %24 : vector<2x8x1xf32> -> vector<2x8x1xf32>
    %27 = vector.broadcast %26 : vector<2x8x1xf32> to vector<2x8x128xf32>
    %28 = arith.mulf %25, %27 : vector<2x8x128xf32>
    %29 = vector.extract_strided_slice %28 {offsets = [0, 0, 0], sizes = [2, 8, 32], strides = [1, 1, 1]} : vector<2x8x128xf32> to vector<2x8x32xf32>
    %c0_21 = arith.constant 0 : index
    %c0_22 = arith.constant 0 : index
    %c0_23 = arith.constant 0 : index
    %30 = vector.load %arg3[%c0_21, %c0_22, %c0_23] : memref<2x8x32xf32, #tpu.memory_space<vmem>>, vector<2x8x32xf32>
    %31 = arith.addf %30, %29 : vector<2x8x32xf32>
    %cst_24 = arith.constant dense<0.000000e+00> : vector<2x8xf32>
    %32 = vector.multi_reduction <add>, %31, %cst_24 [2] : vector<2x8x32xf32> to vector<2x8xf32>
    %33 = vector.shape_cast %32 : vector<2x8xf32> to vector<2x8x1xf32>
    %cst_25 = arith.constant 3.125000e-02 : f32
    %34 = vector.broadcast %cst_25 : f32 to vector<2x8x1xf32>
    %35 = arith.mulf %33, %34 : vector<2x8x1xf32>
    %36 = vector.broadcast %35 : vector<2x8x1xf32> to vector<2x8x32xf32>
    %37 = arith.subf %31, %36 : vector<2x8x32xf32>
    %38 = arith.mulf %37, %37 : vector<2x8x32xf32>
    %cst_26 = arith.constant dense<0.000000e+00> : vector<2x8xf32>
    %39 = vector.multi_reduction <add>, %38, %cst_26 [2] : vector<2x8x32xf32> to vector<2x8xf32>
    %40 = vector.shape_cast %39 : vector<2x8xf32> to vector<2x8x1xf32>
    %cst_27 = arith.constant 3.125000e-02 : f32
    %41 = vector.broadcast %cst_27 : f32 to vector<2x8x1xf32>
    %42 = arith.mulf %40, %41 : vector<2x8x1xf32>
    %cst_28 = arith.constant 9.99999974E-6 : f32
    %43 = vector.broadcast %cst_28 : f32 to vector<2x8x1xf32>
    %44 = arith.addf %42, %43 : vector<2x8x1xf32>
    %45 = math.rsqrt %44 : vector<2x8x1xf32>
    %46 = vector.broadcast %45 : vector<2x8x1xf32> to vector<2x8x32xf32>
    %47 = arith.mulf %37, %46 : vector<2x8x32xf32>
    %c0_29 = arith.constant 0 : index
    %c0_30 = arith.constant 0 : index
    %48 = vector.load %arg7[%c0_29, %c0_30] : memref<1x32xf32, #tpu.memory_space<vmem>>, vector<1x32xf32>
    %49 = vector.shape_cast %48 : vector<1x32xf32> to vector<1x1x32xf32>
    %50 = vector.broadcast %49 : vector<1x1x32xf32> to vector<2x8x32xf32>
    %51 = arith.mulf %47, %50 : vector<2x8x32xf32>
    %c0_31 = arith.constant 0 : index
    %c0_32 = arith.constant 0 : index
    %52 = vector.load %arg8[%c0_31, %c0_32] : memref<1x32xf32, #tpu.memory_space<vmem>>, vector<1x32xf32>
    %53 = vector.shape_cast %52 : vector<1x32xf32> to vector<1x1x32xf32>
    %54 = vector.broadcast %53 : vector<1x1x32xf32> to vector<2x8x32xf32>
    %55 = arith.addf %51, %54 : vector<2x8x32xf32>
    %c0_33 = arith.constant 0 : index
    %c0_34 = arith.constant 0 : index
    %c0_35 = arith.constant 0 : index
    %56 = vector.load %arg9[%c0_33, %c0_34, %c0_35] : memref<2x8x32xf32, #tpu.memory_space<vmem>>, vector<2x8x32xf32>
    tpu.vector_store %arg9[%c0_33, %c0_34, %c0_35], %55 {strides = array<i32>} : memref<2x8x32xf32, #tpu.memory_space<vmem>>, vector<2x8x32xf32>,
    return
  }
  func.func @transform_0(%arg0: i32) -> (i32, i32, i32) {
    %c0_i32 = arith.constant 0 : i32
    %c0_i32_0 = arith.constant 0 : i32
    %c0_i32_1 = arith.constant 0 : i32
    return %arg0, %c0_i32, %c0_i32_0 : i32, i32, i32
  }
  func.func @transform_1(%arg0: i32) -> (i32, i32, i32) {
    %c0_i32 = arith.constant 0 : i32
    %c0_i32_0 = arith.constant 0 : i32
    %c0_i32_1 = arith.constant 0 : i32
    return %arg0, %c0_i32, %c0_i32_0 : i32, i32, i32
  }
  func.func @transform_2(%arg0: i32) -> (i32, i32, i32) {
    %c0_i32 = arith.constant 0 : i32
    %c0_i32_0 = arith.constant 0 : i32
    %c0_i32_1 = arith.constant 0 : i32
    return %arg0, %c0_i32, %c0_i32_0 : i32, i32, i32
  }
  func.func @transform_3(%arg0: i32) -> (i32, i32) {
    %c0_i32 = arith.constant 0 : i32
    %c0_i32_0 = arith.constant 0 : i32
    %c0_i32_1 = arith.constant 0 : i32
    return %c0_i32, %c0_i32_0 : i32, i32
  }
  func.func @transform_4(%arg0: i32) -> (i32, i32) {
    %c0_i32 = arith.constant 0 : i32
    %c0_i32_0 = arith.constant 0 : i32
    %c0_i32_1 = arith.constant 0 : i32
    return %c0_i32, %c0_i32_0 : i32, i32
  }
  func.func @transform_5(%arg0: i32) -> (i32, i32) {
    %c0_i32 = arith.constant 0 : i32
    %c0_i32_0 = arith.constant 0 : i32
    %c0_i32_1 = arith.constant 0 : i32
    return %c0_i32, %c0_i32_0 : i32, i32
  }
  func.func @transform_6(%arg0: i32) -> (i32, i32) {
    %c0_i32 = arith.constant 0 : i32
    %c0_i32_0 = arith.constant 0 : i32
    %c0_i32_1 = arith.constant 0 : i32
    return %c0_i32, %c0_i32_0 : i32, i32
  }
  func.func @transform_7(%arg0: i32) -> (i32, i32) {
    %c0_i32 = arith.constant 0 : i32
    %c0_i32_0 = arith.constant 0 : i32
    %c0_i32_1 = arith.constant 0 : i32
    return %c0_i32, %c0_i32_0 : i32, i32
  }
  func.func @transform_8(%arg0: i32) -> (i32, i32, i32) {
    %c0_i32 = arith.constant 0 : i32
    %c0_i32_0 = arith.constant 0 : i32
    %c0_i32_1 = arith.constant 0 : i32
    return %arg0, %c0_i32, %c0_i32_0 : i32, i32, i32
  }
}

</mosaic_0001>

<llo_original>
// kernel: tpu_custom_call.1
$region0: #{tpu_custom_call.1}
  #allocation0 [shape = 'u32[]', space=smem, size = 0x4, offset = 0x4, fixed_abs, tag = 'smem constant byte address 0x4 - core index']
  #allocation1 [shape = 'u32[144,128]{1,0:T(1,128)}', space=vmem, size = 0x12000, scoped, tag = 'internal scratch']
  %s0 = inlined_call_operand.hbm [shape: f32[2,8,32], index: 0, kind: input, shape index: {}]
  %s1 = inlined_call_operand.hbm [shape: f32[2,8,32], index: 1, kind: input, shape index: {}]
  %s2 = inlined_call_operand.hbm [shape: f32[2,8,32], index: 2, kind: input, shape index: {}]
  %s3 = inlined_call_operand.hbm [shape: f32[32,128], index: 3, kind: input, shape index: {}]
  %s4 = inlined_call_operand.hbm [shape: f32[32,128], index: 4, kind: input, shape index: {}]
  %s5 = inlined_call_operand.hbm [shape: f32[32,128], index: 5, kind: input, shape index: {}]
  %s6 = inlined_call_operand.vmem [shape: f32[1,32], index: 6, kind: input, shape index: {}]
  %s7 = inlined_call_operand.vmem [shape: f32[1,32], index: 7, kind: input, shape index: {}]
  %s8 = inlined_call_operand.hbm [shape: f32[2,8,32], index: 8, kind: output, shape index: {}]
  %s9 = sld [smem:[#allocation0]]
  $region66: #{tpu_custom_call.1} parent=0
    _
  %s11 = ssub.s32 1, %s9
  %s12 = scalar_select 0, %s11, %s9
  $region1: #{tpu_custom_call.1} parent=0
    #allocation2 [shape = 'u8[8192]{0}', space=vmem, size = 0x2000, scoped, tag = 'input window, operand 0, single buffered']
    #allocation3 [shape = 's32[1]{0}', space=sflag, size = 0x4, scoped, tag = 'scoped memory for tpu_custom_call.1']
    #allocation4 [shape = 's32[1]{0}', space=sflag, size = 0x4, scoped, tag = 'scoped memory for tpu_custom_call.1']
    #allocation5 [shape = 'u8[8192]{0}', space=vmem, size = 0x2000, scoped, tag = 'input window, operand 1, single buffered']
    #allocation6 [shape = 's32[1]{0}', space=sflag, size = 0x4, scoped, tag = 'scoped memory for tpu_custom_call.1']
    #allocation7 [shape = 'u8[8192]{0}', space=vmem, size = 0x2000, scoped, tag = 'input window, operand 2, single buffered']
    #allocation8 [shape = 'u8[16384]{0}', space=vmem, size = 0x4000, scoped, tag = 'input window, operand 3, single buffered']
    #allocation9 [shape = 's32[1]{0}', space=sflag, size = 0x4, scoped, tag = 'scoped memory for tpu_custom_call.1']
    #allocation10 [shape = 'u8[16384]{0}', space=vmem, size = 0x4000, scoped, tag = 'input window, operand 4, single buffered']
    #allocation11 [shape = 'u8[16384]{0}', space=vmem, size = 0x4000, scoped, tag = 'input window, operand 5, single buffered']
    #allocation12 [shape = 's32[1]{0}', space=sflag, size = 0x4, scoped, tag = 'scoped memory for tpu_custom_call.1']
    #allocation13 [shape = 'u8[8192]{0}', space=vmem, size = 0x2000, scoped, tag = 'output window, operand 0, single buffered']
    %13 = vsyncpa [#allocation3], 0
    %14 = vsyncpa [#allocation6], 0
    %15 = vsyncpa [#allocation9], 0
    %16 = vsyncpa [#allocation12], 0
    %17 = vsyncpa [#allocation4], 0
    // Predicated region
    $region2: #{tpu_custom_call.1} parent=1 // pred_check
      _
    $region3: #{tpu_custom_call.1} parent=1 // pred_check_branch
      %19 = sbr.rel (0) target = $region5
    $region4: #{tpu_custom_call.1} parent=1 // pred_region
      %s21 = ssub.s32 256, 256
      %22 = vsyncadd [#allocation3], %s21
      %s23 = sshll.u32 [#allocation2], 4
      %s24 = int_to_ptr.vmem [resolvable:$true] %s23
      %29 = dma.hbm_to_vmem [thread:$0]  %s0, 256, %s24, [#allocation3], 128, 128, 8
    $region5: #{tpu_custom_call.1} parent=1 // pred_fallthru
      _
    // Predicated region
    $region6: #{tpu_custom_call.1} parent=1 // pred_check
      _
    $region7: #{tpu_custom_call.1} parent=1 // pred_check_branch
      %31 = sbr.rel (0) target = $region9
    $region8: #{tpu_custom_call.1} parent=1 // pred_region
      %s33 = ssub.s32 256, 256
      %34 = vsyncadd [#allocation6], %s33
      %s35 = sshll.u32 [#allocation5], 4
      %s36 = int_to_ptr.vmem [resolvable:$true] %s35
      %41 = dma.hbm_to_vmem [thread:$0]  %s1, 256, %s36, [#allocation6], 128, 128, 8
    $region9: #{tpu_custom_call.1} parent=1 // pred_fallthru
      _
    // Predicated region
    $region10: #{tpu_custom_call.1} parent=1 // pred_check
      _
    $region11: #{tpu_custom_call.1} parent=1 // pred_check_branch
      %43 = sbr.rel (0) target = $region13
    $region12: #{tpu_custom_call.1} parent=1 // pred_region
      %s45 = ssub.s32 256, 256
      %46 = vsyncadd [#allocation6], %s45
      %s47 = sshll.u32 [#allocation7], 4
      %s48 = int_to_ptr.vmem [resolvable:$true] %s47
      %53 = dma.hbm_to_vmem [thread:$0]  %s2, 256, %s48, [#allocation6], 128, 128, 8
    $region13: #{tpu_custom_call.1} parent=1 // pred_fallthru
      _
    // Predicated region
    $region14: #{tpu_custom_call.1} parent=1 // pred_check
      _
    $region15: #{tpu_custom_call.1} parent=1 // pred_check_branch
      %55 = sbr.rel (0) target = $region17
    $region16: #{tpu_custom_call.1} parent=1 // pred_region
      %s57 = ssub.s32 512, 512
      %58 = vsyncadd [#allocation9], %s57
      %s59 = sshll.u32 [#allocation8], 4
      %s60 = int_to_ptr.vmem [resolvable:$true] %s59
      %65 = dma.hbm_to_vmem [thread:$0]  %s3, 512, %s60, [#allocation9], 128, 128, 8
    $region17: #{tpu_custom_call.1} parent=1 // pred_fallthru
      _
    // Predicated region
    $region18: #{tpu_custom_call.1} parent=1 // pred_check
      _
    $region19: #{tpu_custom_call.1} parent=1 // pred_check_branch
      %67 = sbr.rel (0) target = $region21
    $region20: #{tpu_custom_call.1} parent=1 // pred_region
      %s69 = ssub.s32 512, 512
      %70 = vsyncadd [#allocation9], %s69
      %s71 = sshll.u32 [#allocation10], 4
      %s72 = int_to_ptr.vmem [resolvable:$true] %s71
      %77 = dma.hbm_to_vmem [thread:$0]  %s4, 512, %s72, [#allocation9], 128, 128, 8
    $region21: #{tpu_custom_call.1} parent=1 // pred_fallthru
      _
    // Predicated region
    $region22: #{tpu_custom_call.1} parent=1 // pred_check
      _
    $region23: #{tpu_custom_call.1} parent=1 // pred_check_branch
      %79 = sbr.rel (0) target = $region25
    $region24: #{tpu_custom_call.1} parent=1 // pred_region
      %s81 = ssub.s32 512, 512
      %82 = vsyncadd [#allocation12], %s81
      %s83 = sshll.u32 [#allocation11], 4
      %s84 = int_to_ptr.vmem [resolvable:$true] %s83
      %89 = dma.hbm_to_vmem [thread:$0]  %s5, 512, %s84, [#allocation12], 128, 128, 8
    $region25: #{tpu_custom_call.1} parent=1 // pred_fallthru
      _
    // Predicated region
    $region26: #{tpu_custom_call.1} parent=1 // pred_check
      _
    $region27: #{tpu_custom_call.1} parent=1 // pred_check_branch
      %91 = sbr.rel (0) target = $region29
    $region28: #{tpu_custom_call.1} parent=1 // pred_region
      _
    $region29: #{tpu_custom_call.1} parent=1 // pred_fallthru
      _
    // Predicated region
    $region30: #{tpu_custom_call.1} parent=1 // pred_check
      _
    $region31: #{tpu_custom_call.1} parent=1 // pred_check_branch
      %93 = sbr.rel (0) target = $region33
    $region32: #{tpu_custom_call.1} parent=1 // pred_region
      _
    $region33: #{tpu_custom_call.1} parent=1 // pred_fallthru
      _
    // Predicated region
    $region34: #{tpu_custom_call.1} parent=1 // pred_check
      _
    $region35: #{tpu_custom_call.1} parent=1 // pred_check_branch
      %95 = sbr.rel (0) target = $region37
    $region36: #{tpu_custom_call.1} parent=1 // pred_region
      %96 = dma.done [#allocation3], 256
    $region37: #{tpu_custom_call.1} parent=1 // pred_fallthru
      _
    // Predicated region
    $region38: #{tpu_custom_call.1} parent=1 // pred_check
      _
    $region39: #{tpu_custom_call.1} parent=1 // pred_check_branch
      %98 = sbr.rel (0) target = $region41
    $region40: #{tpu_custom_call.1} parent=1 // pred_region
      %99 = dma.done [#allocation6], 256
    $region41: #{tpu_custom_call.1} parent=1 // pred_fallthru
      _
    // Predicated region
    $region42: #{tpu_custom_call.1} parent=1 // pred_check
      _
    $region43: #{tpu_custom_call.1} parent=1 // pred_check_branch
      %101 = sbr.rel (0) target = $region45
    $region44: #{tpu_custom_call.1} parent=1 // pred_region
      %102 = dma.done [#allocation6], 256
    $region45: #{tpu_custom_call.1} parent=1 // pred_fallthru
      _
    // Predicated region
    $region46: #{tpu_custom_call.1} parent=1 // pred_check
      _
    $region47: #{tpu_custom_call.1} parent=1 // pred_check_branch
      %104 = sbr.rel (0) target = $region49
    $region48: #{tpu_custom_call.1} parent=1 // pred_region
      %105 = dma.done [#allocation9], 512
    $region49: #{tpu_custom_call.1} parent=1 // pred_fallthru
      _
    // Predicated region
    $region50: #{tpu_custom_call.1} parent=1 // pred_check
      _
    $region51: #{tpu_custom_call.1} parent=1 // pred_check_branch
      %107 = sbr.rel (0) target = $region53
    $region52: #{tpu_custom_call.1} parent=1 // pred_region
      %108 = dma.done [#allocation9], 512
    $region53: #{tpu_custom_call.1} parent=1 // pred_fallthru
      _
    // Predicated region
    $region54: #{tpu_custom_call.1} parent=1 // pred_check
      _
    $region55: #{tpu_custom_call.1} parent=1 // pred_check_branch
      %110 = sbr.rel (0) target = $region57
    $region56: #{tpu_custom_call.1} parent=1 // pred_region
      %111 = dma.done [#allocation12], 512
    $region57: #{tpu_custom_call.1} parent=1 // pred_fallthru
      _
    %v112 = vld [vmem:[#allocation8] sm:$0xff]
    %v113 = vld [vmem:[#allocation8 + $0x8] sm:$0xff]
    %v114 = vld [vmem:[#allocation8 + $0x10] sm:$0xff]
    %v115 = vld [vmem:[#allocation8 + $0x18] sm:$0xff]
    %v116 = vld [vmem:[#allocation10] sm:$0xff]
    %v117 = vld [vmem:[#allocation10 + $0x8] sm:$0xff]
    %v118 = vld [vmem:[#allocation10 + $0x10] sm:$0xff]
    %v119 = vld [vmem:[#allocation10 + $0x18] sm:$0xff]
    %v120 = vld [vmem:[#allocation11] sm:$0xff]
    %v121 = vld [vmem:[#allocation11 + $0x8] sm:$0xff]
    %v122 = vld [vmem:[#allocation11 + $0x10] sm:$0xff]
    %v123 = vld [vmem:[#allocation11 + $0x18] sm:$0xff]
    %v124 = vld [vmem:[#allocation2] sm:$0xff]
    %v125 = vld [vmem:[#allocation2 + $0x8] sm:$0xff]
    %vm126 = vcmask 261120
    %v128 = vsel %vm126, %v124, 0
    %v131 = vsel %vm126, %v125, 0
    %133 = vmatprep.subr.mxu0 0.0
    %134 = vmatpush1.msra.mxu0 %v112
    %135 = vmatprep.subr.mxu0 0.0
    %136 = vmatpush1.msra.mxu0 %v113
    %137 = vmatprep.subr.mxu0 0.0
    %138 = vmatpush1.msra.mxu0 %v114
    %139 = vmatprep.subr.mxu0 0.0
    %140 = vmatpush1.msra.mxu0 %v115
    %141 = vmatprep.subr.mxu0 0.0
    %142 = vmatpush1.msra.mxu0 0.0
    %143 = vmatprep.subr.mxu0 0.0
    %144 = vmatpush1.msra.mxu0 0.0
    %145 = vmatprep.subr.mxu0 0.0
    %146 = vmatpush1.msra.mxu0 0.0
    %147 = vmatprep.subr.mxu0 0.0
    %148 = vmatpush1.msra.mxu0 0.0
    %149 = vmatprep.subr.mxu0 0.0
    %150 = vmatpush1.msra.mxu0 0.0
    %151 = vmatprep.subr.mxu0 0.0
    %152 = vmatpush1.msra.mxu0 0.0
    %153 = vmatprep.subr.mxu0 0.0
    %154 = vmatpush1.msra.mxu0 0.0
    %155 = vmatprep.subr.mxu0 0.0
    %156 = vmatpush1.msra.mxu0 0.0
    %157 = vmatprep.subr.mxu0 0.0
    %158 = vmatpush1.msra.mxu0 0.0
    %159 = vmatprep.subr.mxu0 0.0
    %160 = vmatpush1.msra.mxu0 0.0
    %161 = vmatprep.subr.mxu0 0.0
    %162 = vmatpush1.msra.mxu0 0.0
    %163 = vmatprep.subr.mxu0 0.0
    %164 = vmatpush1.msra.mxu0 0.0
    %165 = vmatprep.subr.mxu0 0.0
    %166 = vmatpush1.msra.mxu0 0.0
    %167 = vmatprep.subr.mxu0 0.0
    %168 = vmatpush1.msra.mxu0 0.0
    %169 = vmatprep.subr.mxu0 0.0
    %170 = vmatpush1.msra.mxu0 0.0
    %171 = vmatprep.subr.mxu0 0.0
    %172 = vmatpush1.msra.mxu0 0.0
    %173 = vmatprep.subr.mxu0 0.0
    %174 = vmatpush1.msra.mxu0 0.0
    %175 = vmatprep.subr.mxu0 0.0
    %176 = vmatpush1.msra.mxu0 0.0
    %177 = vmatprep.subr.mxu0 0.0
    %178 = vmatpush1.msra.mxu0 0.0
    %179 = vmatprep.subr.mxu0 0.0
    %180 = vmatpush1.msra.mxu0 0.0
    %181 = vmatprep.subr.mxu0 0.0
    %182 = vmatpush1.msra.mxu0 0.0
    %183 = vmatprep.subr.mxu0 0.0
    %184 = vmatpush1.msra.mxu0 0.0
    %185 = vmatprep.subr.mxu0 0.0
    %186 = vmatpush1.msra.mxu0 0.0
    %187 = vmatprep.subr.mxu0 0.0
    %188 = vmatpush1.msra.mxu0 0.0
    %189 = vmatprep.subr.mxu0 0.0
    %190 = vmatpush1.msra.mxu0 0.0
    %191 = vmatprep.subr.mxu0 0.0
    %192 = vmatpush1.msra.mxu0 0.0
    %193 = vmatprep.subr.mxu0 0.0
    %194 = vmatpush1.msra.mxu0 0.0
    %195 = vmatprep.subr.mxu0 0.0
    %196 = vmatpush1.msra.mxu0 0.0
    %197 = vmatprep.mubr.f32.mxu0 0.0
    %198 = vmatmul.mubr.f32.gmra.mrb[0].mxu0 %v128
    %v199 = vpop.f32.mrb[0].mxu0
    %v200 = vadd.f32 0.0, %v199
    %v201 = vpop.f32.mrb[0].mxu0
    %202 = vmatprep.mubr.f32.mxu0 0.0
    %203 = vmatmul.mubr.f32.gmra.mrb[0].mxu0 %v131
    %v204 = vpop.f32.mrb[0].mxu0
    %v205 = vadd.f32 0.0, %v204
    %v206 = vpop.f32.mrb[0].mxu0
    %207 = vdwg.mxu0
    %v208 = vld [vmem:[#allocation5] sm:$0xff]
    %v209 = vld [vmem:[#allocation5 + $0x8] sm:$0xff]
    %v211 = vsel %vm126, %v208, 0
    %v214 = vsel %vm126, %v209, 0
    %216 = vmatprep.subr.mxu0 0.0
    %217 = vmatpush1.msra.mxu0 %v116
    %218 = vmatprep.subr.mxu0 0.0
    %219 = vmatpush1.msra.mxu0 %v117
    %220 = vmatprep.subr.mxu0 0.0
    %221 = vmatpush1.msra.mxu0 %v118
    %222 = vmatprep.subr.mxu0 0.0
    %223 = vmatpush1.msra.mxu0 %v119
    %224 = vmatprep.subr.mxu0 0.0
    %225 = vmatpush1.msra.mxu0 0.0
    %226 = vmatprep.subr.mxu0 0.0
    %227 = vmatpush1.msra.mxu0 0.0
    %228 = vmatprep.subr.mxu0 0.0
    %229 = vmatpush1.msra.mxu0 0.0
    %230 = vmatprep.subr.mxu0 0.0
    %231 = vmatpush1.msra.mxu0 0.0
    %232 = vmatprep.subr.mxu0 0.0
    %233 = vmatpush1.msra.mxu0 0.0
    %234 = vmatprep.subr.mxu0 0.0
    %235 = vmatpush1.msra.mxu0 0.0
    %236 = vmatprep.subr.mxu0 0.0
    %237 = vmatpush1.msra.mxu0 0.0
    %238 = vmatprep.subr.mxu0 0.0
    %239 = vmatpush1.msra.mxu0 0.0
    %240 = vmatprep.subr.mxu0 0.0
    %241 = vmatpush1.msra.mxu0 0.0
    %242 = vmatprep.subr.mxu0 0.0
    %243 = vmatpush1.msra.mxu0 0.0
    %244 = vmatprep.subr.mxu0 0.0
    %245 = vmatpush1.msra.mxu0 0.0
    %246 = vmatprep.subr.mxu0 0.0
    %247 = vmatpush1.msra.mxu0 0.0
    %248 = vmatprep.subr.mxu0 0.0
    %249 = vmatpush1.msra.mxu0 0.0
    %250 = vmatprep.subr.mxu0 0.0
    %251 = vmatpush1.msra.mxu0 0.0
    %252 = vmatprep.subr.mxu0 0.0
    %253 = vmatpush1.msra.mxu0 0.0
    %254 = vmatprep.subr.mxu0 0.0
    %255 = vmatpush1.msra.mxu0 0.0
    %256 = vmatprep.subr.mxu0 0.0
    %257 = vmatpush1.msra.mxu0 0.0
    %258 = vmatprep.subr.mxu0 0.0
    %259 = vmatpush1.msra.mxu0 0.0
    %260 = vmatprep.subr.mxu0 0.0
    %261 = vmatpush1.msra.mxu0 0.0
    %262 = vmatprep.subr.mxu0 0.0
    %263 = vmatpush1.msra.mxu0 0.0
    %264 = vmatprep.subr.mxu0 0.0
    %265 = vmatpush1.msra.mxu0 0.0
    %266 = vmatprep.subr.mxu0 0.0
    %267 = vmatpush1.msra.mxu0 0.0
    %268 = vmatprep.subr.mxu0 0.0
    %269 = vmatpush1.msra.mxu0 0.0
    %270 = vmatprep.subr.mxu0 0.0
    %271 = vmatpush1.msra.mxu0 0.0
    %272 = vmatprep.subr.mxu0 0.0
    %273 = vmatpush1.msra.mxu0 0.0
    %274 = vmatprep.subr.mxu0 0.0
    %275 = vmatpush1.msra.mxu0 0.0
    %276 = vmatprep.subr.mxu0 0.0
    %277 = vmatpush1.msra.mxu0 0.0
    %278 = vmatprep.subr.mxu0 0.0
    %279 = vmatpush1.msra.mxu0 0.0
    %280 = vmatprep.mubr.f32.mxu0 0.0
    %281 = vmatmul.mubr.f32.gmra.mrb[0].mxu0 %v211
    %v282 = vpop.f32.mrb[0].mxu0
    %v283 = vadd.f32 0.0, %v282
    %v284 = vpop.f32.mrb[0].mxu0
    %285 = vmatprep.mubr.f32.mxu0 0.0
    %286 = vmatmul.mubr.f32.gmra.mrb[0].mxu0 %v214
    %v287 = vpop.f32.mrb[0].mxu0
    %v288 = vadd.f32 0.0, %v287
    %v289 = vpop.f32.mrb[0].mxu0
    %290 = vdwg.mxu0
    %v291 = vld [vmem:[#allocation7] sm:$0xff]
    %v292 = vld [vmem:[#allocation7 + $0x8] sm:$0xff]
    %v294 = vsel %vm126, %v291, 0
    %v297 = vsel %vm126, %v292, 0
    %299 = vmatprep.subr.mxu0 0.0
    %300 = vmatpush1.msra.mxu0 %v120
    %301 = vmatprep.subr.mxu0 0.0
    %302 = vmatpush1.msra.mxu0 %v121
    %303 = vmatprep.subr.mxu0 0.0
    %304 = vmatpush1.msra.mxu0 %v122
    %305 = vmatprep.subr.mxu0 0.0
    %306 = vmatpush1.msra.mxu0 %v123
    %307 = vmatprep.subr.mxu0 0.0
    %308 = vmatpush1.msra.mxu0 0.0
    %309 = vmatprep.subr.mxu0 0.0
    %310 = vmatpush1.msra.mxu0 0.0
    %311 = vmatprep.subr.mxu0 0.0
    %312 = vmatpush1.msra.mxu0 0.0
    %313 = vmatprep.subr.mxu0 0.0
    %314 = vmatpush1.msra.mxu0 0.0
    %315 = vmatprep.subr.mxu0 0.0
    %316 = vmatpush1.msra.mxu0 0.0
    %317 = vmatprep.subr.mxu0 0.0
    %318 = vmatpush1.msra.mxu0 0.0
    %319 = vmatprep.subr.mxu0 0.0
    %320 = vmatpush1.msra.mxu0 0.0
    %321 = vmatprep.subr.mxu0 0.0
    %322 = vmatpush1.msra.mxu0 0.0
    %323 = vmatprep.subr.mxu0 0.0
    %324 = vmatpush1.msra.mxu0 0.0
    %325 = vmatprep.subr.mxu0 0.0
    %326 = vmatpush1.msra.mxu0 0.0
    %327 = vmatprep.subr.mxu0 0.0
    %328 = vmatpush1.msra.mxu0 0.0
    %329 = vmatprep.subr.mxu0 0.0
    %330 = vmatpush1.msra.mxu0 0.0
    %331 = vmatprep.subr.mxu0 0.0
    %332 = vmatpush1.msra.mxu0 0.0
    %333 = vmatprep.subr.mxu0 0.0
    %334 = vmatpush1.msra.mxu0 0.0
    %335 = vmatprep.subr.mxu0 0.0
    %336 = vmatpush1.msra.mxu0 0.0
    %337 = vmatprep.subr.mxu0 0.0
    %338 = vmatpush1.msra.mxu0 0.0
    %339 = vmatprep.subr.mxu0 0.0
    %340 = vmatpush1.msra.mxu0 0.0
    %341 = vmatprep.subr.mxu0 0.0
    %342 = vmatpush1.msra.mxu0 0.0
    %343 = vmatprep.subr.mxu0 0.0
    %344 = vmatpush1.msra.mxu0 0.0
    %345 = vmatprep.subr.mxu0 0.0
    %346 = vmatpush1.msra.mxu0 0.0
    %347 = vmatprep.subr.mxu0 0.0
    %348 = vmatpush1.msra.mxu0 0.0
    %349 = vmatprep.subr.mxu0 0.0
    %350 = vmatpush1.msra.mxu0 0.0
    %351 = vmatprep.subr.mxu0 0.0
    %352 = vmatpush1.msra.mxu0 0.0
    %353 = vmatprep.subr.mxu0 0.0
    %354 = vmatpush1.msra.mxu0 0.0
    %355 = vmatprep.subr.mxu0 0.0
    %356 = vmatpush1.msra.mxu0 0.0
    %357 = vmatprep.subr.mxu0 0.0
    %358 = vmatpush1.msra.mxu0 0.0
    %359 = vmatprep.subr.mxu0 0.0
    %360 = vmatpush1.msra.mxu0 0.0
    %361 = vmatprep.subr.mxu0 0.0
    %362 = vmatpush1.msra.mxu0 0.0
    %363 = vmatprep.mubr.f32.mxu0 0.0
    %364 = vmatmul.mubr.f32.gmra.mrb[0].mxu0 %v294
    %v365 = vpop.f32.mrb[0].mxu0
    %v366 = vadd.f32 0.0, %v365
    %v367 = vpop.f32.mrb[0].mxu0
    %368 = vmatprep.mubr.f32.mxu0 0.0
    %369 = vmatmul.mubr.f32.gmra.mrb[0].mxu0 %v297
    %v370 = vpop.f32.mrb[0].mxu0
    %v371 = vadd.f32 0.0, %v370
    %v372 = vpop.f32.mrb[0].mxu0
    %373 = vdwg.mxu0
    %v374 = vmul.f32 %v200, 0.17677666
    %v375 = vmul.f32 %v205, 0.17677666
    %376 = vmatprep.subr.mxu0 0.0
    %377 = vmatpush1.xpose.msra.mxu0 %v283
    %378 = vmatprep.subr.mxu0 0.0
    %379 = vmatpush1.xpose.msra.mxu0 0.0
    %380 = vmatprep.subr.mxu0 0.0
    %381 = vmatpush1.xpose.msra.mxu0 0.0
    %382 = vmatprep.subr.mxu0 0.0
    %383 = vmatpush1.xpose.msra.mxu0 0.0
    %384 = vmatprep.subr.mxu0 0.0
    %385 = vmatpush1.xpose.msra.mxu0 0.0
    %386 = vmatprep.subr.mxu0 0.0
    %387 = vmatpush1.xpose.msra.mxu0 0.0
    %388 = vmatprep.subr.mxu0 0.0
    %389 = vmatpush1.xpose.msra.mxu0 0.0
    %390 = vmatprep.subr.mxu0 0.0
    %391 = vmatpush1.xpose.msra.mxu0 0.0
    %392 = vmatprep.subr.mxu0 0.0
    %393 = vmatpush1.xpose.msra.mxu0 0.0
    %394 = vmatprep.subr.mxu0 0.0
    %395 = vmatpush1.xpose.msra.mxu0 0.0
    %396 = vmatprep.subr.mxu0 0.0
    %397 = vmatpush1.xpose.msra.mxu0 0.0
    %398 = vmatprep.subr.mxu0 0.0
    %399 = vmatpush1.xpose.msra.mxu0 0.0
    %400 = vmatprep.subr.mxu0 0.0
    %401 = vmatpush1.xpose.msra.mxu0 0.0
    %402 = vmatprep.subr.mxu0 0.0
    %403 = vmatpush1.xpose.msra.mxu0 0.0
    %404 = vmatprep.subr.mxu0 0.0
    %405 = vmatpush1.xpose.msra.mxu0 0.0
    %406 = vmatprep.subr.mxu0 0.0
    %407 = vmatpush1.xpose.msra.mxu0 0.0
    %408 = vmatprep.subr.mxu0 0.0
    %409 = vmatpush1.xpose.msra.mxu0 0.0
    %410 = vmatprep.subr.mxu0 0.0
    %411 = vmatpush1.xpose.msra.mxu0 0.0
    %412 = vmatprep.subr.mxu0 0.0
    %413 = vmatpush1.xpose.msra.mxu0 0.0
    %414 = vmatprep.subr.mxu0 0.0
    %415 = vmatpush1.xpose.msra.mxu0 0.0
    %416 = vmatprep.subr.mxu0 0.0
    %417 = vmatpush1.xpose.msra.mxu0 0.0
    %418 = vmatprep.subr.mxu0 0.0
    %419 = vmatpush1.xpose.msra.mxu0 0.0
    %420 = vmatprep.subr.mxu0 0.0
    %421 = vmatpush1.xpose.msra.mxu0 0.0
    %422 = vmatprep.subr.mxu0 0.0
    %423 = vmatpush1.xpose.msra.mxu0 0.0
    %424 = vmatprep.subr.mxu0 0.0
    %425 = vmatpush1.xpose.msra.mxu0 0.0
    %426 = vmatprep.subr.mxu0 0.0
    %427 = vmatpush1.xpose.msra.mxu0 0.0
    %428 = vmatprep.subr.mxu0 0.0
    %429 = vmatpush1.xpose.msra.mxu0 0.0
    %430 = vmatprep.subr.mxu0 0.0
    %431 = vmatpush1.xpose.msra.mxu0 0.0
    %432 = vmatprep.subr.mxu0 0.0
    %433 = vmatpush1.xpose.msra.mxu0 0.0
    %434 = vmatprep.subr.mxu0 0.0
    %435 = vmatpush1.xpose.msra.mxu0 0.0
    %436 = vmatprep.subr.mxu0 0.0
    %437 = vmatpush1.xpose.msra.mxu0 0.0
    %438 = vmatprep.subr.mxu0 0.0
    %439 = vmatpush1.xpose.msra.mxu0 0.0
    %440 = vmatprep.mubr.f32.mxu0 0.0
    %441 = vmatmul.mubr.f32.gmra.mrb[0].mxu0 %v374
    %v442 = vpop.f32.mrb[0].mxu0
    %v443 = vadd.f32 0.0, %v442
    %v444 = vpop.f32.mrb[0].mxu0
    %445 = vdwg.mxu0
    %446 = vmatprep.subr.mxu0 0.0
    %447 = vmatpush1.xpose.msra.mxu0 %v288
    %448 = vmatprep.subr.mxu0 0.0
    %449 = vmatpush1.xpose.msra.mxu0 0.0
    %450 = vmatprep.subr.mxu0 0.0
    %451 = vmatpush1.xpose.msra.mxu0 0.0
    %452 = vmatprep.subr.mxu0 0.0
    %453 = vmatpush1.xpose.msra.mxu0 0.0
    %454 = vmatprep.subr.mxu0 0.0
    %455 = vmatpush1.xpose.msra.mxu0 0.0
    %456 = vmatprep.subr.mxu0 0.0
    %457 = vmatpush1.xpose.msra.mxu0 0.0
    %458 = vmatprep.subr.mxu0 0.0
    %459 = vmatpush1.xpose.msra.mxu0 0.0
    %460 = vmatprep.subr.mxu0 0.0
    %461 = vmatpush1.xpose.msra.mxu0 0.0
    %462 = vmatprep.subr.mxu0 0.0
    %463 = vmatpush1.xpose.msra.mxu0 0.0
    %464 = vmatprep.subr.mxu0 0.0
    %465 = vmatpush1.xpose.msra.mxu0 0.0
    %466 = vmatprep.subr.mxu0 0.0
    %467 = vmatpush1.xpose.msra.mxu0 0.0
    %468 = vmatprep.subr.mxu0 0.0
    %469 = vmatpush1.xpose.msra.mxu0 0.0
    %470 = vmatprep.subr.mxu0 0.0
    %471 = vmatpush1.xpose.msra.mxu0 0.0
    %472 = vmatprep.subr.mxu0 0.0
    %473 = vmatpush1.xpose.msra.mxu0 0.0
    %474 = vmatprep.subr.mxu0 0.0
    %475 = vmatpush1.xpose.msra.mxu0 0.0
    %476 = vmatprep.subr.mxu0 0.0
    %477 = vmatpush1.xpose.msra.mxu0 0.0
    %478 = vmatprep.subr.mxu0 0.0
    %479 = vmatpush1.xpose.msra.mxu0 0.0
    %480 = vmatprep.subr.mxu0 0.0
    %481 = vmatpush1.xpose.msra.mxu0 0.0
    %482 = vmatprep.subr.mxu0 0.0
    %483 = vmatpush1.xpose.msra.mxu0 0.0
    %484 = vmatprep.subr.mxu0 0.0
    %485 = vmatpush1.xpose.msra.mxu0 0.0
    %486 = vmatprep.subr.mxu0 0.0
    %487 = vmatpush1.xpose.msra.mxu0 0.0
    %488 = vmatprep.subr.mxu0 0.0
    %489 = vmatpush1.xpose.msra.mxu0 0.0
    %490 = vmatprep.subr.mxu0 0.0
    %491 = vmatpush1.xpose.msra.mxu0 0.0
    %492 = vmatprep.subr.mxu0 0.0
    %493 = vmatpush1.xpose.msra.mxu0 0.0
    %494 = vmatprep.subr.mxu0 0.0
    %495 = vmatpush1.xpose.msra.mxu0 0.0
    %496 = vmatprep.subr.mxu0 0.0
    %497 = vmatpush1.xpose.msra.mxu0 0.0
    %498 = vmatprep.subr.mxu0 0.0
    %499 = vmatpush1.xpose.msra.mxu0 0.0
    %500 = vmatprep.subr.mxu0 0.0
    %501 = vmatpush1.xpose.msra.mxu0 0.0
    %502 = vmatprep.subr.mxu0 0.0
    %503 = vmatpush1.xpose.msra.mxu0 0.0
    %504 = vmatprep.subr.mxu0 0.0
    %505 = vmatpush1.xpose.msra.mxu0 0.0
    %506 = vmatprep.subr.mxu0 0.0
    %507 = vmatpush1.xpose.msra.mxu0 0.0
    %508 = vmatprep.subr.mxu0 0.0
    %509 = vmatpush1.xpose.msra.mxu0 0.0
    %510 = vmatprep.mubr.f32.mxu0 0.0
    %511 = vmatmul.mubr.f32.gmra.mrb[0].mxu0 %v375
    %v512 = vpop.f32.mrb[0].mxu0
    %v513 = vadd.f32 0.0, %v512
    %v514 = vpop.f32.mrb[0].mxu0
    %515 = vdwg.mxu0
    %vm516 = vcmask 64512
    %v517 = vsel %vm516, %v443, -inf
    %518 = vmax.xlane.f32.xlu0 %v517
    %v519 = vpop.xlane.xlu0 %518
    %v520 = vsel %vm516, %v513, -inf
    %521 = vmax.xlane.f32.xlu0 %v520
    %v522 = vpop.xlane.xlu0 %521
    %v523 = vsub.f32 %v443, %v519
    %v524 = vsub.f32 %v513, %v522
    %v525 = vmul.f32 %v523, 1.442695
    %v526 = vpow.pop %v525
    %v527 = vmul.f32 %v524, 1.442695
    %v528 = vpow.pop %v527
    %v529 = vsel %vm516, %v526, 0.0
    %530 = vadd.xlane.f32.xlu0 %v529
    %v531 = vpop.xlane.xlu0 %530
    %v532 = vsel %vm516, %v528, 0.0
    %533 = vadd.xlane.f32.xlu0 %v532
    %v534 = vpop.xlane.xlu0 %533
    %v536 = vsel %vm516, %v526, 0
    %538 = vmatprep.subr.mxu0 0.0
    %539 = vmatpush1.msra.mxu0 %v366
    %540 = vmatprep.subr.mxu0 0.0
    %541 = vmatpush1.msra.mxu0 0.0
    %542 = vmatprep.subr.mxu0 0.0
    %543 = vmatpush1.msra.mxu0 0.0
    %544 = vmatprep.subr.mxu0 0.0
    %545 = vmatpush1.msra.mxu0 0.0
    %546 = vmatprep.subr.mxu0 0.0
    %547 = vmatpush1.msra.mxu0 0.0
    %548 = vmatprep.subr.mxu0 0.0
    %549 = vmatpush1.msra.mxu0 0.0
    %550 = vmatprep.subr.mxu0 0.0
    %551 = vmatpush1.msra.mxu0 0.0
    %552 = vmatprep.subr.mxu0 0.0
    %553 = vmatpush1.msra.mxu0 0.0
    %554 = vmatprep.subr.mxu0 0.0
    %555 = vmatpush1.msra.mxu0 0.0
    %556 = vmatprep.subr.mxu0 0.0
    %557 = vmatpush1.msra.mxu0 0.0
    %558 = vmatprep.subr.mxu0 0.0
    %559 = vmatpush1.msra.mxu0 0.0
    %560 = vmatprep.subr.mxu0 0.0
    %561 = vmatpush1.msra.mxu0 0.0
    %562 = vmatprep.subr.mxu0 0.0
    %563 = vmatpush1.msra.mxu0 0.0
    %564 = vmatprep.subr.mxu0 0.0
    %565 = vmatpush1.msra.mxu0 0.0
    %566 = vmatprep.subr.mxu0 0.0
    %567 = vmatpush1.msra.mxu0 0.0
    %568 = vmatprep.subr.mxu0 0.0
    %569 = vmatpush1.msra.mxu0 0.0
    %570 = vmatprep.subr.mxu0 0.0
    %571 = vmatpush1.msra.mxu0 0.0
    %572 = vmatprep.subr.mxu0 0.0
    %573 = vmatpush1.msra.mxu0 0.0
    %574 = vmatprep.subr.mxu0 0.0
    %575 = vmatpush1.msra.mxu0 0.0
    %576 = vmatprep.subr.mxu0 0.0
    %577 = vmatpush1.msra.mxu0 0.0
    %578 = vmatprep.subr.mxu0 0.0
    %579 = vmatpush1.msra.mxu0 0.0
    %580 = vmatprep.subr.mxu0 0.0
    %581 = vmatpush1.msra.mxu0 0.0
    %582 = vmatprep.subr.mxu0 0.0
    %583 = vmatpush1.msra.mxu0 0.0
    %584 = vmatprep.subr.mxu0 0.0
    %585 = vmatpush1.msra.mxu0 0.0
    %586 = vmatprep.subr.mxu0 0.0
    %587 = vmatpush1.msra.mxu0 0.0
    %588 = vmatprep.subr.mxu0 0.0
    %589 = vmatpush1.msra.mxu0 0.0
    %590 = vmatprep.subr.mxu0 0.0
    %591 = vmatpush1.msra.mxu0 0.0
    %592 = vmatprep.subr.mxu0 0.0
    %593 = vmatpush1.msra.mxu0 0.0
    %594 = vmatprep.subr.mxu0 0.0
    %595 = vmatpush1.msra.mxu0 0.0
    %596 = vmatprep.subr.mxu0 0.0
    %597 = vmatpush1.msra.mxu0 0.0
    %598 = vmatprep.subr.mxu0 0.0
    %599 = vmatpush1.msra.mxu0 0.0
    %600 = vmatprep.subr.mxu0 0.0
    %601 = vmatpush1.msra.mxu0 0.0
    %602 = vmatprep.mubr.f32.mxu0 0.0
    %603 = vmatmul.mubr.f32.gmra.mrb[0].mxu0 %v536
    %v604 = vpop.f32.mrb[0].mxu0
    %v605 = vadd.f32 0.0, %v604
    %v606 = vpop.f32.mrb[0].mxu0
    %607 = vdwg.mxu0
    %v609 = vsel %vm516, %v528, 0
    %611 = vmatprep.subr.mxu0 0.0
    %612 = vmatpush1.msra.mxu0 %v371
    %613 = vmatprep.subr.mxu0 0.0
    %614 = vmatpush1.msra.mxu0 0.0
    %615 = vmatprep.subr.mxu0 0.0
    %616 = vmatpush1.msra.mxu0 0.0
    %617 = vmatprep.subr.mxu0 0.0
    %618 = vmatpush1.msra.mxu0 0.0
    %619 = vmatprep.subr.mxu0 0.0
    %620 = vmatpush1.msra.mxu0 0.0
    %621 = vmatprep.subr.mxu0 0.0
    %622 = vmatpush1.msra.mxu0 0.0
    %623 = vmatprep.subr.mxu0 0.0
    %624 = vmatpush1.msra.mxu0 0.0
    %625 = vmatprep.subr.mxu0 0.0
    %626 = vmatpush1.msra.mxu0 0.0
    %627 = vmatprep.subr.mxu0 0.0
    %628 = vmatpush1.msra.mxu0 0.0
    %629 = vmatprep.subr.mxu0 0.0
    %630 = vmatpush1.msra.mxu0 0.0
    %631 = vmatprep.subr.mxu0 0.0
    %632 = vmatpush1.msra.mxu0 0.0
    %633 = vmatprep.subr.mxu0 0.0
    %634 = vmatpush1.msra.mxu0 0.0
    %635 = vmatprep.subr.mxu0 0.0
    %636 = vmatpush1.msra.mxu0 0.0
    %637 = vmatprep.subr.mxu0 0.0
    %638 = vmatpush1.msra.mxu0 0.0
    %639 = vmatprep.subr.mxu0 0.0
    %640 = vmatpush1.msra.mxu0 0.0
    %641 = vmatprep.subr.mxu0 0.0
    %642 = vmatpush1.msra.mxu0 0.0
    %643 = vmatprep.subr.mxu0 0.0
    %644 = vmatpush1.msra.mxu0 0.0
    %645 = vmatprep.subr.mxu0 0.0
    %646 = vmatpush1.msra.mxu0 0.0
    %647 = vmatprep.subr.mxu0 0.0
    %648 = vmatpush1.msra.mxu0 0.0
    %649 = vmatprep.subr.mxu0 0.0
    %650 = vmatpush1.msra.mxu0 0.0
    %651 = vmatprep.subr.mxu0 0.0
    %652 = vmatpush1.msra.mxu0 0.0
    %653 = vmatprep.subr.mxu0 0.0
    %654 = vmatpush1.msra.mxu0 0.0
    %655 = vmatprep.subr.mxu0 0.0
    %656 = vmatpush1.msra.mxu0 0.0
    %657 = vmatprep.subr.mxu0 0.0
    %658 = vmatpush1.msra.mxu0 0.0
    %659 = vmatprep.subr.mxu0 0.0
    %660 = vmatpush1.msra.mxu0 0.0
    %661 = vmatprep.subr.mxu0 0.0
    %662 = vmatpush1.msra.mxu0 0.0
    %663 = vmatprep.subr.mxu0 0.0
    %664 = vmatpush1.msra.mxu0 0.0
    %665 = vmatprep.subr.mxu0 0.0
    %666 = vmatpush1.msra.mxu0 0.0
    %667 = vmatprep.subr.mxu0 0.0
    %668 = vmatpush1.msra.mxu0 0.0
    %669 = vmatprep.subr.mxu0 0.0
    %670 = vmatpush1.msra.mxu0 0.0
    %671 = vmatprep.subr.mxu0 0.0
    %672 = vmatpush1.msra.mxu0 0.0
    %673 = vmatprep.subr.mxu0 0.0
    %674 = vmatpush1.msra.mxu0 0.0
    %675 = vmatprep.mubr.f32.mxu0 0.0
    %676 = vmatmul.mubr.f32.gmra.mrb[0].mxu0 %v609
    %v677 = vpop.f32.mrb[0].mxu0
    %v678 = vadd.f32 0.0, %v677
    %v679 = vpop.f32.mrb[0].mxu0
    %680 = vdwg.mxu0
    %v681 = vrcp.pop %v531
    %v682 = vrcp.pop %v534
    %v683 = vmul.f32 %v605, %v681
    %v684 = vmul.f32 %v678, %v682
    %v685 = vadd.f32 %v291, %v683
    %v686 = vadd.f32 %v292, %v684
    %v687 = vsel %vm126, %v685, 0.0
    %688 = vadd.xlane.f32.xlu0 %v687
    %v689 = vpop.xlane.xlu0 %688
    %v690 = vsel %vm126, %v686, 0.0
    %691 = vadd.xlane.f32.xlu0 %v690
    %v692 = vpop.xlane.xlu0 %691
    %v693 = vmul.f32 %v689, 0.03125
    %v694 = vmul.f32 %v692, 0.03125
    %v695 = vsub.f32 %v685, %v693
    %v696 = vsub.f32 %v686, %v694
    %v697 = vmul.f32 %v695, %v695
    %v698 = vmul.f32 %v696, %v696
    %v699 = vsel %vm126, %v697, 0.0
    %700 = vadd.xlane.f32.xlu0 %v699
    %v701 = vpop.xlane.xlu0 %700
    %v702 = vsel %vm126, %v698, 0.0
    %703 = vadd.xlane.f32.xlu0 %v702
    %v704 = vpop.xlane.xlu0 %703
    %v705 = vmul.f32 %v701, 0.03125
    %v706 = vmul.f32 %v704, 0.03125
    %v707 = vadd.f32 %v705, 1e-05
    %v708 = vadd.f32 %v706, 1e-05
    %v709 = vrsqrt.pop %v707
    %v710 = vrsqrt.pop %v708
    %v711 = vmul.f32 %v695, %v709
    %v712 = vmul.f32 %v696, %v710
    %v713 = vld [vmem:[%s6] sm:$0x1]
    %v715 = vlaneseq
    %v716 = vshrl.u32 %v715, 7
    %v717 = vsub.s32 0, %v716
    %v718 = vrot.slane %v713, %v717
    %v720 = vmul.f32 %v711, %v718
    %v721 = vmul.f32 %v712, %v718
    %v722 = vld [vmem:[%s7] sm:$0x1]
    %v724 = vlaneseq
    %v725 = vshrl.u32 %v724, 7
    %v726 = vsub.s32 0, %v725
    %v727 = vrot.slane %v722, %v726
    %v729 = vadd.f32 %v720, %v727
    %v730 = vadd.f32 %v721, %v727
    %731 = vst.msk [vmem:[#allocation13] sm:$0xff] %vm126, %v729
    %732 = vst.msk [vmem:[#allocation13 + $0x8] sm:$0xff] %vm126, %v730
    // Predicated region
    $region58: #{tpu_custom_call.1} parent=1 // pred_check
      _
    $region59: #{tpu_custom_call.1} parent=1 // pred_check_branch
      %734 = sbr.rel (0) target = $region61
    $region60: #{tpu_custom_call.1} parent=1 // pred_region
      %s736 = ssub.s32 256, 256
      %737 = vsyncadd [#allocation4], %s736
      %s738 = sshll.u32 [#allocation13], 4
      %s739 = int_to_ptr.vmem [resolvable:$true] %s738
      %744 = dma.vmem_to_hbm [thread:$0]  %s739, 256, %s8, [#allocation4], 128, 128, 8
    $region61: #{tpu_custom_call.1} parent=1 // pred_fallthru
      _
    // Predicated region
    $region62: #{tpu_custom_call.1} parent=1 // pred_check
      _
    $region63: #{tpu_custom_call.1} parent=1 // pred_check_branch
      %746 = sbr.rel (0) target = $region65
    $region64: #{tpu_custom_call.1} parent=1 // pred_region
      %747 = dma.done [#allocation4], 256
    $region65: #{tpu_custom_call.1} parent=1 // pred_fallthru
      _
    %748 = vsyncpa [#allocation3], 1
    %749 = vsyncpa [#allocation6], 1
    %750 = vsyncpa [#allocation9], 1
    %751 = vsyncpa [#allocation12], 1
    %752 = vsyncpa [#allocation4], 1

// kernel: tpu_custom_call.1
$region0: #{tpu_custom_call.1}
  #allocation0 [shape = 'u32[]', space=smem, size = 0x4, offset = 0x4, fixed_abs, tag = 'smem constant byte address 0x4 - core index']
  #allocation1 [shape = 'u32[144,128]{1,0:T(1,128)}', space=vmem, size = 0x12000, scoped, tag = 'internal scratch']
  %s0 = inlined_call_operand.hbm [shape: f32[2,8,32], index: 0, kind: input, shape index: {}]
  %s1 = inlined_call_operand.hbm [shape: f32[2,8,32], index: 1, kind: input, shape index: {}]
  %s2 = inlined_call_operand.hbm [shape: f32[2,8,32], index: 2, kind: input, shape index: {}]
  %s3 = inlined_call_operand.hbm [shape: f32[32,128], index: 3, kind: input, shape index: {}]
  %s4 = inlined_call_operand.hbm [shape: f32[32,128], index: 4, kind: input, shape index: {}]
  %s5 = inlined_call_operand.hbm [shape: f32[32,128], index: 5, kind: input, shape index: {}]
  %s6 = inlined_call_operand.vmem [shape: f32[1,32], index: 6, kind: input, shape index: {}]
  %s7 = inlined_call_operand.vmem [shape: f32[1,32], index: 7, kind: input, shape index: {}]
  %s8 = inlined_call_operand.hbm [shape: f32[2,8,32], index: 8, kind: output, shape index: {}]
  %s9 = sld [smem:[#allocation0]]
  $region66: #{tpu_custom_call.1} parent=0
    _
  %s11 = ssub.s32 1, %s9
  %s12 = scalar_select 0, %s11, %s9
  $region1: #{tpu_custom_call.1} parent=0
    #allocation2 [shape = 'u8[8192]{0}', space=vmem, size = 0x2000, scoped, tag = 'input window, operand 0, single buffered']
    #allocation3 [shape = 's32[1]{0}', space=sflag, size = 0x4, scoped, tag = 'scoped memory for tpu_custom_call.1']
    #allocation4 [shape = 's32[1]{0}', space=sflag, size = 0x4, scoped, tag = 'scoped memory for tpu_custom_call.1']
    #allocation5 [shape = 'u8[8192]{0}', space=vmem, size = 0x2000, scoped, tag = 'input window, operand 1, single buffered']
    #allocation6 [shape = 's32[1]{0}', space=sflag, size = 0x4, scoped, tag = 'scoped memory for tpu_custom_call.1']
    #allocation7 [shape = 'u8[8192]{0}', space=vmem, size = 0x2000, scoped, tag = 'input window, operand 2, single buffered']
    #allocation8 [shape = 'u8[16384]{0}', space=vmem, size = 0x4000, scoped, tag = 'input window, operand 3, single buffered']
    #allocation9 [shape = 's32[1]{0}', space=sflag, size = 0x4, scoped, tag = 'scoped memory for tpu_custom_call.1']
    #allocation10 [shape = 'u8[16384]{0}', space=vmem, size = 0x4000, scoped, tag = 'input window, operand 4, single buffered']
    #allocation11 [shape = 'u8[16384]{0}', space=vmem, size = 0x4000, scoped, tag = 'input window, operand 5, single buffered']
    #allocation12 [shape = 's32[1]{0}', space=sflag, size = 0x4, scoped, tag = 'scoped memory for tpu_custom_call.1']
    #allocation13 [shape = 'u8[8192]{0}', space=vmem, size = 0x2000, scoped, tag = 'output window, operand 0, single buffered']
    %13 = vsyncpa [#allocation3], 0
    %14 = vsyncpa [#allocation6], 0
    %15 = vsyncpa [#allocation9], 0
    %16 = vsyncpa [#allocation12], 0
    %17 = vsyncpa [#allocation4], 0
    // Predicated region
    $region2: #{tpu_custom_call.1} parent=1 // pred_check
      _
    $region3: #{tpu_custom_call.1} parent=1 // pred_check_branch
      %19 = sbr.rel (0) target = $region5
    $region4: #{tpu_custom_call.1} parent=1 // pred_region
      %s21 = ssub.s32 256, 256
      %22 = vsyncadd [#allocation3], %s21
      %s23 = sshll.u32 [#allocation2], 4
      %s24 = int_to_ptr.vmem [resolvable:$true] %s23
      %29 = dma.hbm_to_vmem [thread:$0]  %s0, 256, %s24, [#allocation3], 128, 128, 8
    $region5: #{tpu_custom_call.1} parent=1 // pred_fallthru
      _
    // Predicated region
    $region6: #{tpu_custom_call.1} parent=1 // pred_check
      _
    $region7: #{tpu_custom_call.1} parent=1 // pred_check_branch
      %31 = sbr.rel (0) target = $region9
    $region8: #{tpu_custom_call.1} parent=1 // pred_region
      %s33 = ssub.s32 256, 256
      %34 = vsyncadd [#allocation6], %s33
      %s35 = sshll.u32 [#allocation5], 4
      %s36 = int_to_ptr.vmem [resolvable:$true] %s35
      %41 = dma.hbm_to_vmem [thread:$0]  %s1, 256, %s36, [#allocation6], 128, 128, 8
    $region9: #{tpu_custom_call.1} parent=1 // pred_fallthru
      _
    // Predicated region
    $region10: #{tpu_custom_call.1} parent=1 // pred_check
      _
    $region11: #{tpu_custom_call.1} parent=1 // pred_check_branch
      %43 = sbr.rel (0) target = $region13
    $region12: #{tpu_custom_call.1} parent=1 // pred_region
      %s45 = ssub.s32 256, 256
      %46 = vsyncadd [#allocation6], %s45
      %s47 = sshll.u32 [#allocation7], 4
      %s48 = int_to_ptr.vmem [resolvable:$true] %s47
      %53 = dma.hbm_to_vmem [thread:$0]  %s2, 256, %s48, [#allocation6], 128, 128, 8
    $region13: #{tpu_custom_call.1} parent=1 // pred_fallthru
      _
    // Predicated region
    $region14: #{tpu_custom_call.1} parent=1 // pred_check
      _
    $region15: #{tpu_custom_call.1} parent=1 // pred_check_branch
      %55 = sbr.rel (0) target = $region17
    $region16: #{tpu_custom_call.1} parent=1 // pred_region
      %s57 = ssub.s32 512, 512
      %58 = vsyncadd [#allocation9], %s57
      %s59 = sshll.u32 [#allocation8], 4
      %s60 = int_to_ptr.vmem [resolvable:$true] %s59
      %65 = dma.hbm_to_vmem [thread:$0]  %s3, 512, %s60, [#allocation9], 128, 128, 8
    $region17: #{tpu_custom_call.1} parent=1 // pred_fallthru
      _
    // Predicated region
    $region18: #{tpu_custom_call.1} parent=1 // pred_check
      _
    $region19: #{tpu_custom_call.1} parent=1 // pred_check_branch
      %67 = sbr.rel (0) target = $region21
    $region20: #{tpu_custom_call.1} parent=1 // pred_region
      %s69 = ssub.s32 512, 512
      %70 = vsyncadd [#allocation9], %s69
      %s71 = sshll.u32 [#allocation10], 4
      %s72 = int_to_ptr.vmem [resolvable:$true] %s71
      %77 = dma.hbm_to_vmem [thread:$0]  %s4, 512, %s72, [#allocation9], 128, 128, 8
    $region21: #{tpu_custom_call.1} parent=1 // pred_fallthru
      _
    // Predicated region
    $region22: #{tpu_custom_call.1} parent=1 // pred_check
      _
    $region23: #{tpu_custom_call.1} parent=1 // pred_check_branch
      %79 = sbr.rel (0) target = $region25
    $region24: #{tpu_custom_call.1} parent=1 // pred_region
      %s81 = ssub.s32 512, 512
      %82 = vsyncadd [#allocation12], %s81
      %s83 = sshll.u32 [#allocation11], 4
      %s84 = int_to_ptr.vmem [resolvable:$true] %s83
      %89 = dma.hbm_to_vmem [thread:$0]  %s5, 512, %s84, [#allocation12], 128, 128, 8
    $region25: #{tpu_custom_call.1} parent=1 // pred_fallthru
      _
    // Predicated region
    $region26: #{tpu_custom_call.1} parent=1 // pred_check
      _
    $region27: #{tpu_custom_call.1} parent=1 // pred_check_branch
      %91 = sbr.rel (0) target = $region29
    $region28: #{tpu_custom_call.1} parent=1 // pred_region
      _
    $region29: #{tpu_custom_call.1} parent=1 // pred_fallthru
      _
    // Predicated region
    $region30: #{tpu_custom_call.1} parent=1 // pred_check
      _
    $region31: #{tpu_custom_call.1} parent=1 // pred_check_branch
      %93 = sbr.rel (0) target = $region33
    $region32: #{tpu_custom_call.1} parent=1 // pred_region
      _
    $region33: #{tpu_custom_call.1} parent=1 // pred_fallthru
      _
    // Predicated region
    $region34: #{tpu_custom_call.1} parent=1 // pred_check
      _
    $region35: #{tpu_custom_call.1} parent=1 // pred_check_branch
      %95 = sbr.rel (0) target = $region37
    $region36: #{tpu_custom_call.1} parent=1 // pred_region
      %96 = dma.done [#allocation3], 256
    $region37: #{tpu_custom_call.1} parent=1 // pred_fallthru
      _
    // Predicated region
    $region38: #{tpu_custom_call.1} parent=1 // pred_check
      _
    $region39: #{tpu_custom_call.1} parent=1 // pred_check_branch
      %98 = sbr.rel (0) target = $region41
    $region40: #{tpu_custom_call.1} parent=1 // pred_region
      %99 = dma.done [#allocation6], 256
    $region41: #{tpu_custom_call.1} parent=1 // pred_fallthru
      _
    // Predicated region
    $region42: #{tpu_custom_call.1} parent=1 // pred_check
      _
    $region43: #{tpu_custom_call.1} parent=1 // pred_check_branch
      %101 = sbr.rel (0) target = $region45
    $region44: #{tpu_custom_call.1} parent=1 // pred_region
      %102 = dma.done [#allocation6], 256
    $region45: #{tpu_custom_call.1} parent=1 // pred_fallthru
      _
    // Predicated region
    $region46: #{tpu_custom_call.1} parent=1 // pred_check
      _
    $region47: #{tpu_custom_call.1} parent=1 // pred_check_branch
      %104 = sbr.rel (0) target = $region49
    $region48: #{tpu_custom_call.1} parent=1 // pred_region
      %105 = dma.done [#allocation9], 512
    $region49: #{tpu_custom_call.1} parent=1 // pred_fallthru
      _
    // Predicated region
    $region50: #{tpu_custom_call.1} parent=1 // pred_check
      _
    $region51: #{tpu_custom_call.1} parent=1 // pred_check_branch
      %107 = sbr.rel (0) target = $region53
    $region52: #{tpu_custom_call.1} parent=1 // pred_region
      %108 = dma.done [#allocation9], 512
    $region53: #{tpu_custom_call.1} parent=1 // pred_fallthru
      _
    // Predicated region
    $region54: #{tpu_custom_call.1} parent=1 // pred_check
      _
    $region55: #{tpu_custom_call.1} parent=1 // pred_check_branch
      %110 = sbr.rel (0) target = $region57
    $region56: #{tpu_custom_call.1} parent=1 // pred_region
      %111 = dma.done [#allocation12], 512
    $region57: #{tpu_custom_call.1} parent=1 // pred_fallthru
      _
    %v112 = vld [vmem:[#allocation8] sm:$0xff]
    %v113 = vld [vmem:[#allocation8 + $0x8] sm:$0xff]
    %v114 = vld [vmem:[#allocation8 + $0x10] sm:$0xff]
    %v115 = vld [vmem:[#allocation8 + $0x18] sm:$0xff]
    %v116 = vld [vmem:[#allocation10] sm:$0xff]
    %v117 = vld [vmem:[#allocation10 + $0x8] sm:$0xff]
    %v118 = vld [vmem:[#allocation10 + $0x10] sm:$0xff]
    %v119 = vld [vmem:[#allocation10 + $0x18] sm:$0xff]
    %v120 = vld [vmem:[#allocation11] sm:$0xff]
    %v121 = vld [vmem:[#allocation11 + $0x8] sm:$0xff]
    %v122 = vld [vmem:[#allocation11 + $0x10] sm:$0xff]
    %v123 = vld [vmem:[#allocation11 + $0x18] sm:$0xff]
    %v124 = vld [vmem:[#allocation2] sm:$0xff]
    %v125 = vld [vmem:[#allocation2 + $0x8] sm:$0xff]
    %vm126 = vcmask 261120
    %v128 = vsel %vm126, %v124, 0
    %v131 = vsel %vm126, %v125, 0
    %133 = vmatprep.subr.mxu0 0.0
    %134 = vmatpush1.msra.mxu0 %v112
    %135 = vmatprep.subr.mxu0 0.0
    %136 = vmatpush1.msra.mxu0 %v113
    %137 = vmatprep.subr.mxu0 0.0
    %138 = vmatpush1.msra.mxu0 %v114
    %139 = vmatprep.subr.mxu0 0.0
    %140 = vmatpush1.msra.mxu0 %v115
    %141 = vmatprep.subr.mxu0 0.0
    %142 = vmatpush1.msra.mxu0 0.0
    %143 = vmatprep.subr.mxu0 0.0
    %144 = vmatpush1.msra.mxu0 0.0
    %145 = vmatprep.subr.mxu0 0.0
    %146 = vmatpush1.msra.mxu0 0.0
    %147 = vmatprep.subr.mxu0 0.0
    %148 = vmatpush1.msra.mxu0 0.0
    %149 = vmatprep.subr.mxu0 0.0
    %150 = vmatpush1.msra.mxu0 0.0
    %151 = vmatprep.subr.mxu0 0.0
    %152 = vmatpush1.msra.mxu0 0.0
    %153 = vmatprep.subr.mxu0 0.0
    %154 = vmatpush1.msra.mxu0 0.0
    %155 = vmatprep.subr.mxu0 0.0
    %156 = vmatpush1.msra.mxu0 0.0
    %157 = vmatprep.subr.mxu0 0.0
    %158 = vmatpush1.msra.mxu0 0.0
    %159 = vmatprep.subr.mxu0 0.0
    %160 = vmatpush1.msra.mxu0 0.0
    %161 = vmatprep.subr.mxu0 0.0
    %162 = vmatpush1.msra.mxu0 0.0
    %163 = vmatprep.subr.mxu0 0.0
    %164 = vmatpush1.msra.mxu0 0.0
    %165 = vmatprep.subr.mxu0 0.0
    %166 = vmatpush1.msra.mxu0 0.0
    %167 = vmatprep.subr.mxu0 0.0
    %168 = vmatpush1.msra.mxu0 0.0
    %169 = vmatprep.subr.mxu0 0.0
    %170 = vmatpush1.msra.mxu0 0.0
    %171 = vmatprep.subr.mxu0 0.0
    %172 = vmatpush1.msra.mxu0 0.0
    %173 = vmatprep.subr.mxu0 0.0
    %174 = vmatpush1.msra.mxu0 0.0
    %175 = vmatprep.subr.mxu0 0.0
    %176 = vmatpush1.msra.mxu0 0.0
    %177 = vmatprep.subr.mxu0 0.0
    %178 = vmatpush1.msra.mxu0 0.0
    %179 = vmatprep.subr.mxu0 0.0
    %180 = vmatpush1.msra.mxu0 0.0
    %181 = vmatprep.subr.mxu0 0.0
    %182 = vmatpush1.msra.mxu0 0.0
    %183 = vmatprep.subr.mxu0 0.0
    %184 = vmatpush1.msra.mxu0 0.0
    %185 = vmatprep.subr.mxu0 0.0
    %186 = vmatpush1.msra.mxu0 0.0
    %187 = vmatprep.subr.mxu0 0.0
    %188 = vmatpush1.msra.mxu0 0.0
    %189 = vmatprep.subr.mxu0 0.0
    %190 = vmatpush1.msra.mxu0 0.0
    %191 = vmatprep.subr.mxu0 0.0
    %192 = vmatpush1.msra.mxu0 0.0
    %193 = vmatprep.subr.mxu0 0.0
    %194 = vmatpush1.msra.mxu0 0.0
    %195 = vmatprep.subr.mxu0 0.0
    %196 = vmatpush1.msra.mxu0 0.0
    %197 = vmatprep.mubr.f32.mxu0 0.0
    %198 = vmatmul.mubr.f32.gmra.mrb[0].mxu0 %v128
    %v199 = vpop.f32.mrb[0].mxu0
    %v200 = vadd.f32 0.0, %v199
    %v201 = vpop.f32.mrb[0].mxu0
    %202 = vmatprep.mubr.f32.mxu0 0.0
    %203 = vmatmul.mubr.f32.gmra.mrb[0].mxu0 %v131
    %v204 = vpop.f32.mrb[0].mxu0
    %v205 = vadd.f32 0.0, %v204
    %v206 = vpop.f32.mrb[0].mxu0
    %207 = vdwg.mxu0
    %v208 = vld [vmem:[#allocation5] sm:$0xff]
    %v209 = vld [vmem:[#allocation5 + $0x8] sm:$0xff]
    %v211 = vsel %vm126, %v208, 0
    %v214 = vsel %vm126, %v209, 0
    %216 = vmatprep.subr.mxu0 0.0
    %217 = vmatpush1.msra.mxu0 %v116
    %218 = vmatprep.subr.mxu0 0.0
    %219 = vmatpush1.msra.mxu0 %v117
    %220 = vmatprep.subr.mxu0 0.0
    %221 = vmatpush1.msra.mxu0 %v118
    %222 = vmatprep.subr.mxu0 0.0
    %223 = vmatpush1.msra.mxu0 %v119
    %224 = vmatprep.subr.mxu0 0.0
    %225 = vmatpush1.msra.mxu0 0.0
    %226 = vmatprep.subr.mxu0 0.0
    %227 = vmatpush1.msra.mxu0 0.0
    %228 = vmatprep.subr.mxu0 0.0
    %229 = vmatpush1.msra.mxu0 0.0
    %230 = vmatprep.subr.mxu0 0.0
    %231 = vmatpush1.msra.mxu0 0.0
    %232 = vmatprep.subr.mxu0 0.0
    %233 = vmatpush1.msra.mxu0 0.0
    %234 = vmatprep.subr.mxu0 0.0
    %235 = vmatpush1.msra.mxu0 0.0
    %236 = vmatprep.subr.mxu0 0.0
    %237 = vmatpush1.msra.mxu0 0.0
    %238 = vmatprep.subr.mxu0 0.0
    %239 = vmatpush1.msra.mxu0 0.0
    %240 = vmatprep.subr.mxu0 0.0
    %241 = vmatpush1.msra.mxu0 0.0
    %242 = vmatprep.subr.mxu0 0.0
    %243 = vmatpush1.msra.mxu0 0.0
    %244 = vmatprep.subr.mxu0 0.0
    %245 = vmatpush1.msra.mxu0 0.0
    %246 = vmatprep.subr.mxu0 0.0
    %247 = vmatpush1.msra.mxu0 0.0
    %248 = vmatprep.subr.mxu0 0.0
    %249 = vmatpush1.msra.mxu0 0.0
    %250 = vmatprep.subr.mxu0 0.0
    %251 = vmatpush1.msra.mxu0 0.0
    %252 = vmatprep.subr.mxu0 0.0
    %253 = vmatpush1.msra.mxu0 0.0
    %254 = vmatprep.subr.mxu0 0.0
    %255 = vmatpush1.msra.mxu0 0.0
    %256 = vmatprep.subr.mxu0 0.0
    %257 = vmatpush1.msra.mxu0 0.0
    %258 = vmatprep.subr.mxu0 0.0
    %259 = vmatpush1.msra.mxu0 0.0
    %260 = vmatprep.subr.mxu0 0.0
    %261 = vmatpush1.msra.mxu0 0.0
    %262 = vmatprep.subr.mxu0 0.0
    %263 = vmatpush1.msra.mxu0 0.0
    %264 = vmatprep.subr.mxu0 0.0
    %265 = vmatpush1.msra.mxu0 0.0
    %266 = vmatprep.subr.mxu0 0.0
    %267 = vmatpush1.msra.mxu0 0.0
    %268 = vmatprep.subr.mxu0 0.0
    %269 = vmatpush1.msra.mxu0 0.0
    %270 = vmatprep.subr.mxu0 0.0
    %271 = vmatpush1.msra.mxu0 0.0
    %272 = vmatprep.subr.mxu0 0.0
    %273 = vmatpush1.msra.mxu0 0.0
    %274 = vmatprep.subr.mxu0 0.0
    %275 = vmatpush1.msra.mxu0 0.0
    %276 = vmatprep.subr.mxu0 0.0
    %277 = vmatpush1.msra.mxu0 0.0
    %278 = vmatprep.subr.mxu0 0.0
    %279 = vmatpush1.msra.mxu0 0.0
    %280 = vmatprep.mubr.f32.mxu0 0.0
    %281 = vmatmul.mubr.f32.gmra.mrb[0].mxu0 %v211
    %v282 = vpop.f32.mrb[0].mxu0
    %v283 = vadd.f32 0.0, %v282
    %v284 = vpop.f32.mrb[0].mxu0
    %285 = vmatprep.mubr.f32.mxu0 0.0
    %286 = vmatmul.mubr.f32.gmra.mrb[0].mxu0 %v214
    %v287 = vpop.f32.mrb[0].mxu0
    %v288 = vadd.f32 0.0, %v287
    %v289 = vpop.f32.mrb[0].mxu0
    %290 = vdwg.mxu0
    %v291 = vld [vmem:[#allocation7] sm:$0xff]
    %v292 = vld [vmem:[#allocation7 + $0x8] sm:$0xff]
    %v294 = vsel %vm126, %v291, 0
    %v297 = vsel %vm126, %v292, 0
    %299 = vmatprep.subr.mxu0 0.0
    %300 = vmatpush1.msra.mxu0 %v120
    %301 = vmatprep.subr.mxu0 0.0
    %302 = vmatpush1.msra.mxu0 %v121
    %303 = vmatprep.subr.mxu0 0.0
    %304 = vmatpush1.msra.mxu0 %v122
    %305 = vmatprep.subr.mxu0 0.0
    %306 = vmatpush1.msra.mxu0 %v123
    %307 = vmatprep.subr.mxu0 0.0
    %308 = vmatpush1.msra.mxu0 0.0
    %309 = vmatprep.subr.mxu0 0.0
    %310 = vmatpush1.msra.mxu0 0.0
    %311 = vmatprep.subr.mxu0 0.0
    %312 = vmatpush1.msra.mxu0 0.0
    %313 = vmatprep.subr.mxu0 0.0
    %314 = vmatpush1.msra.mxu0 0.0
    %315 = vmatprep.subr.mxu0 0.0
    %316 = vmatpush1.msra.mxu0 0.0
    %317 = vmatprep.subr.mxu0 0.0
    %318 = vmatpush1.msra.mxu0 0.0
    %319 = vmatprep.subr.mxu0 0.0
    %320 = vmatpush1.msra.mxu0 0.0
    %321 = vmatprep.subr.mxu0 0.0
    %322 = vmatpush1.msra.mxu0 0.0
    %323 = vmatprep.subr.mxu0 0.0
    %324 = vmatpush1.msra.mxu0 0.0
    %325 = vmatprep.subr.mxu0 0.0
    %326 = vmatpush1.msra.mxu0 0.0
    %327 = vmatprep.subr.mxu0 0.0
    %328 = vmatpush1.msra.mxu0 0.0
    %329 = vmatprep.subr.mxu0 0.0
    %330 = vmatpush1.msra.mxu0 0.0
    %331 = vmatprep.subr.mxu0 0.0
    %332 = vmatpush1.msra.mxu0 0.0
    %333 = vmatprep.subr.mxu0 0.0
    %334 = vmatpush1.msra.mxu0 0.0
    %335 = vmatprep.subr.mxu0 0.0
    %336 = vmatpush1.msra.mxu0 0.0
    %337 = vmatprep.subr.mxu0 0.0
    %338 = vmatpush1.msra.mxu0 0.0
    %339 = vmatprep.subr.mxu0 0.0
    %340 = vmatpush1.msra.mxu0 0.0
    %341 = vmatprep.subr.mxu0 0.0
    %342 = vmatpush1.msra.mxu0 0.0
    %343 = vmatprep.subr.mxu0 0.0
    %344 = vmatpush1.msra.mxu0 0.0
    %345 = vmatprep.subr.mxu0 0.0
    %346 = vmatpush1.msra.mxu0 0.0
    %347 = vmatprep.subr.mxu0 0.0
    %348 = vmatpush1.msra.mxu0 0.0
    %349 = vmatprep.subr.mxu0 0.0
    %350 = vmatpush1.msra.mxu0 0.0
    %351 = vmatprep.subr.mxu0 0.0
    %352 = vmatpush1.msra.mxu0 0.0
    %353 = vmatprep.subr.mxu0 0.0
    %354 = vmatpush1.msra.mxu0 0.0
    %355 = vmatprep.subr.mxu0 0.0
    %356 = vmatpush1.msra.mxu0 0.0
    %357 = vmatprep.subr.mxu0 0.0
    %358 = vmatpush1.msra.mxu0 0.0
    %359 = vmatprep.subr.mxu0 0.0
    %360 = vmatpush1.msra.mxu0 0.0
    %361 = vmatprep.subr.mxu0 0.0
    %362 = vmatpush1.msra.mxu0 0.0
    %363 = vmatprep.mubr.f32.mxu0 0.0
    %364 = vmatmul.mubr.f32.gmra.mrb[0].mxu0 %v294
    %v365 = vpop.f32.mrb[0].mxu0
    %v366 = vadd.f32 0.0, %v365
    %v367 = vpop.f32.mrb[0].mxu0
    %368 = vmatprep.mubr.f32.mxu0 0.0
    %369 = vmatmul.mubr.f32.gmra.mrb[0].mxu0 %v297
    %v370 = vpop.f32.mrb[0].mxu0
    %v371 = vadd.f32 0.0, %v370
    %v372 = vpop.f32.mrb[0].mxu0
    %373 = vdwg.mxu0
    %v374 = vmul.f32 %v200, 0.17677666
    %v375 = vmul.f32 %v205, 0.17677666
    %376 = vmatprep.subr.mxu0 0.0
    %377 = vmatpush1.xpose.msra.mxu0 %v283
    %378 = vmatprep.subr.mxu0 0.0
    %379 = vmatpush1.xpose.msra.mxu0 0.0
    %380 = vmatprep.subr.mxu0 0.0
    %381 = vmatpush1.xpose.msra.mxu0 0.0
    %382 = vmatprep.subr.mxu0 0.0
    %383 = vmatpush1.xpose.msra.mxu0 0.0
    %384 = vmatprep.subr.mxu0 0.0
    %385 = vmatpush1.xpose.msra.mxu0 0.0
    %386 = vmatprep.subr.mxu0 0.0
    %387 = vmatpush1.xpose.msra.mxu0 0.0
    %388 = vmatprep.subr.mxu0 0.0
    %389 = vmatpush1.xpose.msra.mxu0 0.0
    %390 = vmatprep.subr.mxu0 0.0
    %391 = vmatpush1.xpose.msra.mxu0 0.0
    %392 = vmatprep.subr.mxu0 0.0
    %393 = vmatpush1.xpose.msra.mxu0 0.0
    %394 = vmatprep.subr.mxu0 0.0
    %395 = vmatpush1.xpose.msra.mxu0 0.0
    %396 = vmatprep.subr.mxu0 0.0
    %397 = vmatpush1.xpose.msra.mxu0 0.0
    %398 = vmatprep.subr.mxu0 0.0
    %399 = vmatpush1.xpose.msra.mxu0 0.0
    %400 = vmatprep.subr.mxu0 0.0
    %401 = vmatpush1.xpose.msra.mxu0 0.0
    %402 = vmatprep.subr.mxu0 0.0
    %403 = vmatpush1.xpose.msra.mxu0 0.0
    %404 = vmatprep.subr.mxu0 0.0
    %405 = vmatpush1.xpose.msra.mxu0 0.0
    %406 = vmatprep.subr.mxu0 0.0
    %407 = vmatpush1.xpose.msra.mxu0 0.0
    %408 = vmatprep.subr.mxu0 0.0
    %409 = vmatpush1.xpose.msra.mxu0 0.0
    %410 = vmatprep.subr.mxu0 0.0
    %411 = vmatpush1.xpose.msra.mxu0 0.0
    %412 = vmatprep.subr.mxu0 0.0
    %413 = vmatpush1.xpose.msra.mxu0 0.0
    %414 = vmatprep.subr.mxu0 0.0
    %415 = vmatpush1.xpose.msra.mxu0 0.0
    %416 = vmatprep.subr.mxu0 0.0
    %417 = vmatpush1.xpose.msra.mxu0 0.0
    %418 = vmatprep.subr.mxu0 0.0
    %419 = vmatpush1.xpose.msra.mxu0 0.0
    %420 = vmatprep.subr.mxu0 0.0
    %421 = vmatpush1.xpose.msra.mxu0 0.0
    %422 = vmatprep.subr.mxu0 0.0
    %423 = vmatpush1.xpose.msra.mxu0 0.0
    %424 = vmatprep.subr.mxu0 0.0
    %425 = vmatpush1.xpose.msra.mxu0 0.0
    %426 = vmatprep.subr.mxu0 0.0
    %427 = vmatpush1.xpose.msra.mxu0 0.0
    %428 = vmatprep.subr.mxu0 0.0
    %429 = vmatpush1.xpose.msra.mxu0 0.0
    %430 = vmatprep.subr.mxu0 0.0
    %431 = vmatpush1.xpose.msra.mxu0 0.0
    %432 = vmatprep.subr.mxu0 0.0
    %433 = vmatpush1.xpose.msra.mxu0 0.0
    %434 = vmatprep.subr.mxu0 0.0
    %435 = vmatpush1.xpose.msra.mxu0 0.0
    %436 = vmatprep.subr.mxu0 0.0
    %437 = vmatpush1.xpose.msra.mxu0 0.0
    %438 = vmatprep.subr.mxu0 0.0
    %439 = vmatpush1.xpose.msra.mxu0 0.0
    %440 = vmatprep.mubr.f32.mxu0 0.0
    %441 = vmatmul.mubr.f32.gmra.mrb[0].mxu0 %v374
    %v442 = vpop.f32.mrb[0].mxu0
    %v443 = vadd.f32 0.0, %v442
    %v444 = vpop.f32.mrb[0].mxu0
    %445 = vdwg.mxu0
    %446 = vmatprep.subr.mxu0 0.0
    %447 = vmatpush1.xpose.msra.mxu0 %v288
    %448 = vmatprep.subr.mxu0 0.0
    %449 = vmatpush1.xpose.msra.mxu0 0.0
    %450 = vmatprep.subr.mxu0 0.0
    %451 = vmatpush1.xpose.msra.mxu0 0.0
    %452 = vmatprep.subr.mxu0 0.0
    %453 = vmatpush1.xpose.msra.mxu0 0.0
    %454 = vmatprep.subr.mxu0 0.0
    %455 = vmatpush1.xpose.msra.mxu0 0.0
    %456 = vmatprep.subr.mxu0 0.0
    %457 = vmatpush1.xpose.msra.mxu0 0.0
    %458 = vmatprep.subr.mxu0 0.0
    %459 = vmatpush1.xpose.msra.mxu0 0.0
    %460 = vmatprep.subr.mxu0 0.0
    %461 = vmatpush1.xpose.msra.mxu0 0.0
    %462 = vmatprep.subr.mxu0 0.0
    %463 = vmatpush1.xpose.msra.mxu0 0.0
    %464 = vmatprep.subr.mxu0 0.0
    %465 = vmatpush1.xpose.msra.mxu0 0.0
    %466 = vmatprep.subr.mxu0 0.0
    %467 = vmatpush1.xpose.msra.mxu0 0.0
    %468 = vmatprep.subr.mxu0 0.0
    %469 = vmatpush1.xpose.msra.mxu0 0.0
    %470 = vmatprep.subr.mxu0 0.0
    %471 = vmatpush1.xpose.msra.mxu0 0.0
    %472 = vmatprep.subr.mxu0 0.0
    %473 = vmatpush1.xpose.msra.mxu0 0.0
    %474 = vmatprep.subr.mxu0 0.0
    %475 = vmatpush1.xpose.msra.mxu0 0.0
    %476 = vmatprep.subr.mxu0 0.0
    %477 = vmatpush1.xpose.msra.mxu0 0.0
    %478 = vmatprep.subr.mxu0 0.0
    %479 = vmatpush1.xpose.msra.mxu0 0.0
    %480 = vmatprep.subr.mxu0 0.0
    %481 = vmatpush1.xpose.msra.mxu0 0.0
    %482 = vmatprep.subr.mxu0 0.0
    %483 = vmatpush1.xpose.msra.mxu0 0.0
    %484 = vmatprep.subr.mxu0 0.0
    %485 = vmatpush1.xpose.msra.mxu0 0.0
    %486 = vmatprep.subr.mxu0 0.0
    %487 = vmatpush1.xpose.msra.mxu0 0.0
    %488 = vmatprep.subr.mxu0 0.0
    %489 = vmatpush1.xpose.msra.mxu0 0.0
    %490 = vmatprep.subr.mxu0 0.0
    %491 = vmatpush1.xpose.msra.mxu0 0.0
    %492 = vmatprep.subr.mxu0 0.0
    %493 = vmatpush1.xpose.msra.mxu0 0.0
    %494 = vmatprep.subr.mxu0 0.0
    %495 = vmatpush1.xpose.msra.mxu0 0.0
    %496 = vmatprep.subr.mxu0 0.0
    %497 = vmatpush1.xpose.msra.mxu0 0.0
    %498 = vmatprep.subr.mxu0 0.0
    %499 = vmatpush1.xpose.msra.mxu0 0.0
    %500 = vmatprep.subr.mxu0 0.0
    %501 = vmatpush1.xpose.msra.mxu0 0.0
    %502 = vmatprep.subr.mxu0 0.0
    %503 = vmatpush1.xpose.msra.mxu0 0.0
    %504 = vmatprep.subr.mxu0 0.0
    %505 = vmatpush1.xpose.msra.mxu0 0.0
    %506 = vmatprep.subr.mxu0 0.0
    %507 = vmatpush1.xpose.msra.mxu0 0.0
    %508 = vmatprep.subr.mxu0 0.0
    %509 = vmatpush1.xpose.msra.mxu0 0.0
    %510 = vmatprep.mubr.f32.mxu0 0.0
    %511 = vmatmul.mubr.f32.gmra.mrb[0].mxu0 %v375
    %v512 = vpop.f32.mrb[0].mxu0
    %v513 = vadd.f32 0.0, %v512
    %v514 = vpop.f32.mrb[0].mxu0
    %515 = vdwg.mxu0
    %vm516 = vcmask 64512
    %v517 = vsel %vm516, %v443, -inf
    %518 = vmax.xlane.f32.xlu0 %v517
    %v519 = vpop.xlane.xlu0 %518
    %v520 = vsel %vm516, %v513, -inf
    %521 = vmax.xlane.f32.xlu0 %v520
    %v522 = vpop.xlane.xlu0 %521
    %v523 = vsub.f32 %v443, %v519
    %v524 = vsub.f32 %v513, %v522
    %v525 = vmul.f32 %v523, 1.442695
    %v526 = vpow.pop %v525
    %v527 = vmul.f32 %v524, 1.442695
    %v528 = vpow.pop %v527
    %v529 = vsel %vm516, %v526, 0.0
    %530 = vadd.xlane.f32.xlu0 %v529
    %v531 = vpop.xlane.xlu0 %530
    %v532 = vsel %vm516, %v528, 0.0
    %533 = vadd.xlane.f32.xlu0 %v532
    %v534 = vpop.xlane.xlu0 %533
    %v536 = vsel %vm516, %v526, 0
    %538 = vmatprep.subr.mxu0 0.0
    %539 = vmatpush1.msra.mxu0 %v366
    %540 = vmatprep.subr.mxu0 0.0
    %541 = vmatpush1.msra.mxu0 0.0
    %542 = vmatprep.subr.mxu0 0.0
    %543 = vmatpush1.msra.mxu0 0.0
    %544 = vmatprep.subr.mxu0 0.0
    %545 = vmatpush1.msra.mxu0 0.0
    %546 = vmatprep.subr.mxu0 0.0
    %547 = vmatpush1.msra.mxu0 0.0
    %548 = vmatprep.subr.mxu0 0.0
    %549 = vmatpush1.msra.mxu0 0.0
    %550 = vmatprep.subr.mxu0 0.0
    %551 = vmatpush1.msra.mxu0 0.0
    %552 = vmatprep.subr.mxu0 0.0
    %553 = vmatpush1.msra.mxu0 0.0
    %554 = vmatprep.subr.mxu0 0.0
    %555 = vmatpush1.msra.mxu0 0.0
    %556 = vmatprep.subr.mxu0 0.0
    %557 = vmatpush1.msra.mxu0 0.0
    %558 = vmatprep.subr.mxu0 0.0
    %559 = vmatpush1.msra.mxu0 0.0
    %560 = vmatprep.subr.mxu0 0.0
    %561 = vmatpush1.msra.mxu0 0.0
    %562 = vmatprep.subr.mxu0 0.0
    %563 = vmatpush1.msra.mxu0 0.0
    %564 = vmatprep.subr.mxu0 0.0
    %565 = vmatpush1.msra.mxu0 0.0
    %566 = vmatprep.subr.mxu0 0.0
    %567 = vmatpush1.msra.mxu0 0.0
    %568 = vmatprep.subr.mxu0 0.0
    %569 = vmatpush1.msra.mxu0 0.0
    %570 = vmatprep.subr.mxu0 0.0
    %571 = vmatpush1.msra.mxu0 0.0
    %572 = vmatprep.subr.mxu0 0.0
    %573 = vmatpush1.msra.mxu0 0.0
    %574 = vmatprep.subr.mxu0 0.0
    %575 = vmatpush1.msra.mxu0 0.0
    %576 = vmatprep.subr.mxu0 0.0
    %577 = vmatpush1.msra.mxu0 0.0
    %578 = vmatprep.subr.mxu0 0.0
    %579 = vmatpush1.msra.mxu0 0.0
    %580 = vmatprep.subr.mxu0 0.0
    %581 = vmatpush1.msra.mxu0 0.0
    %582 = vmatprep.subr.mxu0 0.0
    %583 = vmatpush1.msra.mxu0 0.0
    %584 = vmatprep.subr.mxu0 0.0
    %585 = vmatpush1.msra.mxu0 0.0
    %586 = vmatprep.subr.mxu0 0.0
    %587 = vmatpush1.msra.mxu0 0.0
    %588 = vmatprep.subr.mxu0 0.0
    %589 = vmatpush1.msra.mxu0 0.0
    %590 = vmatprep.subr.mxu0 0.0
    %591 = vmatpush1.msra.mxu0 0.0
    %592 = vmatprep.subr.mxu0 0.0
    %593 = vmatpush1.msra.mxu0 0.0
    %594 = vmatprep.subr.mxu0 0.0
    %595 = vmatpush1.msra.mxu0 0.0
    %596 = vmatprep.subr.mxu0 0.0
    %597 = vmatpush1.msra.mxu0 0.0
    %598 = vmatprep.subr.mxu0 0.0
    %599 = vmatpush1.msra.mxu0 0.0
    %600 = vmatprep.subr.mxu0 0.0
    %601 = vmatpush1.msra.mxu0 0.0
    %602 = vmatprep.mubr.f32.mxu0 0.0
    %603 = vmatmul.mubr.f32.gmra.mrb[0].mxu0 %v536
    %v604 = vpop.f32.mrb[0].mxu0
    %v605 = vadd.f32 0.0, %v604
    %v606 = vpop.f32.mrb[0].mxu0
    %607 = vdwg.mxu0
    %v609 = vsel %vm516, %v528, 0
    %611 = vmatprep.subr.mxu0 0.0
    %612 = vmatpush1.msra.mxu0 %v371
    %613 = vmatprep.subr.mxu0 0.0
    %614 = vmatpush1.msra.mxu0 0.0
    %615 = vmatprep.subr.mxu0 0.0
    %616 = vmatpush1.msra.mxu0 0.0
    %617 = vmatprep.subr.mxu0 0.0
    %618 = vmatpush1.msra.mxu0 0.0
    %619 = vmatprep.subr.mxu0 0.0
    %620 = vmatpush1.msra.mxu0 0.0
    %621 = vmatprep.subr.mxu0 0.0
    %622 = vmatpush1.msra.mxu0 0.0
    %623 = vmatprep.subr.mxu0 0.0
    %624 = vmatpush1.msra.mxu0 0.0
    %625 = vmatprep.subr.mxu0 0.0
    %626 = vmatpush1.msra.mxu0 0.0
    %627 = vmatprep.subr.mxu0 0.0
    %628 = vmatpush1.msra.mxu0 0.0
    %629 = vmatprep.subr.mxu0 0.0
    %630 = vmatpush1.msra.mxu0 0.0
    %631 = vmatprep.subr.mxu0 0.0
    %632 = vmatpush1.msra.mxu0 0.0
    %633 = vmatprep.subr.mxu0 0.0
    %634 = vmatpush1.msra.mxu0 0.0
    %635 = vmatprep.subr.mxu0 0.0
    %636 = vmatpush1.msra.mxu0 0.0
    %637 = vmatprep.subr.mxu0 0.0
    %638 = vmatpush1.msra.mxu0 0.0
    %639 = vmatprep.subr.mxu0 0.0
    %640 = vmatpush1.msra.mxu0 0.0
    %641 = vmatprep.subr.mxu0 0.0
    %642 = vmatpush1.msra.mxu0 0.0
    %643 = vmatprep.subr.mxu0 0.0
    %644 = vmatpush1.msra.mxu0 0.0
    %645 = vmatprep.subr.mxu0 0.0
    %646 = vmatpush1.msra.mxu0 0.0
    %647 = vmatprep.subr.mxu0 0.0
    %648 = vmatpush1.msra.mxu0 0.0
    %649 = vmatprep.subr.mxu0 0.0
    %650 = vmatpush1.msra.mxu0 0.0
    %651 = vmatprep.subr.mxu0 0.0
    %652 = vmatpush1.msra.mxu0 0.0
    %653 = vmatprep.subr.mxu0 0.0
    %654 = vmatpush1.msra.mxu0 0.0
    %655 = vmatprep.subr.mxu0 0.0
    %656 = vmatpush1.msra.mxu0 0.0
    %657 = vmatprep.subr.mxu0 0.0
    %658 = vmatpush1.msra.mxu0 0.0
    %659 = vmatprep.subr.mxu0 0.0
    %660 = vmatpush1.msra.mxu0 0.0
    %661 = vmatprep.subr.mxu0 0.0
    %662 = vmatpush1.msra.mxu0 0.0
    %663 = vmatprep.subr.mxu0 0.0
    %664 = vmatpush1.msra.mxu0 0.0
    %665 = vmatprep.subr.mxu0 0.0
    %666 = vmatpush1.msra.mxu0 0.0
    %667 = vmatprep.subr.mxu0 0.0
    %668 = vmatpush1.msra.mxu0 0.0
    %669 = vmatprep.subr.mxu0 0.0
    %670 = vmatpush1.msra.mxu0 0.0
    %671 = vmatprep.subr.mxu0 0.0
    %672 = vmatpush1.msra.mxu0 0.0
    %673 = vmatprep.subr.mxu0 0.0
    %674 = vmatpush1.msra.mxu0 0.0
    %675 = vmatprep.mubr.f32.mxu0 0.0
    %676 = vmatmul.mubr.f32.gmra.mrb[0].mxu0 %v609
    %v677 = vpop.f32.mrb[0].mxu0
    %v678 = vadd.f32 0.0, %v677
    %v679 = vpop.f32.mrb[0].mxu0
    %680 = vdwg.mxu0
    %v681 = vrcp.pop %v531
    %v682 = vrcp.pop %v534
    %v683 = vmul.f32 %v605, %v681
    %v684 = vmul.f32 %v678, %v682
    %v685 = vadd.f32 %v291, %v683
    %v686 = vadd.f32 %v292, %v684
    %v687 = vsel %vm126, %v685, 0.0
    %688 = vadd.xlane.f32.xlu0 %v687
    %v689 = vpop.xlane.xlu0 %688
    %v690 = vsel %vm126, %v686, 0.0
    %691 = vadd.xlane.f32.xlu0 %v690
    %v692 = vpop.xlane.xlu0 %691
    %v693 = vmul.f32 %v689, 0.03125
    %v694 = vmul.f32 %v692, 0.03125
    %v695 = vsub.f32 %v685, %v693
    %v696 = vsub.f32 %v686, %v694
    %v697 = vmul.f32 %v695, %v695
    %v698 = vmul.f32 %v696, %v696
    %v699 = vsel %vm126, %v697, 0.0
    %700 = vadd.xlane.f32.xlu0 %v699
    %v701 = vpop.xlane.xlu0 %700
    %v702 = vsel %vm126, %v698, 0.0
    %703 = vadd.xlane.f32.xlu0 %v702
    %v704 = vpop.xlane.xlu0 %703
    %v705 = vmul.f32 %v701, 0.03125
    %v706 = vmul.f32 %v704, 0.03125
    %v707 = vadd.f32 %v705, 1e-05
    %v708 = vadd.f32 %v706, 1e-05
    %v709 = vrsqrt.pop %v707
    %v710 = vrsqrt.pop %v708
    %v711 = vmul.f32 %v695, %v709
    %v712 = vmul.f32 %v696, %v710
    %v713 = vld [vmem:[%s6] sm:$0x1]
    %v715 = vlaneseq
    %v716 = vshrl.u32 %v715, 7
    %v717 = vsub.s32 0, %v716
    %v718 = vrot.slane %v713, %v717
    %v720 = vmul.f32 %v711, %v718
    %v721 = vmul.f32 %v712, %v718
    %v722 = vld [vmem:[%s7] sm:$0x1]
    %v724 = vlaneseq
    %v725 = vshrl.u32 %v724, 7
    %v726 = vsub.s32 0, %v725
    %v727 = vrot.slane %v722, %v726
    %v729 = vadd.f32 %v720, %v727
    %v730 = vadd.f32 %v721, %v727
    %731 = vst.msk [vmem:[#allocation13] sm:$0xff] %vm126, %v729
    %732 = vst.msk [vmem:[#allocation13 + $0x8] sm:$0xff] %vm126, %v730
    // Predicated region
    $region58: #{tpu_custom_call.1} parent=1 // pred_check
      _
    $region59: #{tpu_custom_call.1} parent=1 // pred_check_branch
      %734 = sbr.rel (0) target = $region61
    $region60: #{tpu_custom_call.1} parent=1 // pred_region
      %s736 = ssub.s32 256, 256
      %737 = vsyncadd [#allocation4], %s736
      %s738 = sshll.u32 [#allocation13], 4
      %s739 = int_to_ptr.vmem [resolvable:$true] %s738
      %744 = dma.vmem_to_hbm [thread:$0]  %s739, 256, %s8, [#allocation4], 128, 128, 8
    $region61: #{tpu_custom_call.1} parent=1 // pred_fallthru
      _
    // Predicated region
    $region62: #{tpu_custom_call.1} parent=1 // pred_check
      _
    $region63: #{tpu_custom_call.1} parent=1 // pred_check_branch
      %746 = sbr.rel (0) target = $region65
    $region64: #{tpu_custom_call.1} parent=1 // pred_region
      %747 = dma.done [#allocation4], 256
    $region65: #{tpu_custom_call.1} parent=1 // pred_fallthru
      _
    %748 = vsyncpa [#allocation3], 1
    %749 = vsyncpa [#allocation6], 1
    %750 = vsyncpa [#allocation9], 1
    %751 = vsyncpa [#allocation12], 1
    %752 = vsyncpa [#allocation4], 1

</llo_original>
